<compile_context>
chip_gen: v7x
topology: tpu7x:2x2x1
jax: 0.10.0
libtpu: 0.0.40
codegen_flags: <defaults>
</compile_context>

<pallas_src>
import functools

import jax
import jax.numpy as jnp
from jax.experimental import pallas as pl
from jax.experimental.pallas import tpu as pltpu


C_IN, C_HID, C_LAT = 4, 8, 8      # channel sizes of the representative model
C_PAD = 8                         # in/out channels padded to 8 -> 128 lanes


# ----------------------------------------------------------------------------
# Fused forward kernel: one grid step == one batch sample, everything in VMEM.
# ----------------------------------------------------------------------------
def fused_ae_kernel(x_ref, m1_ref, b1_ref, m2_ref, b2_ref,
                    m3_ref, b3_ref, m4_ref, b4_ref,
                    noise_ref, o_ref, *, noise_scale):
    h = x_ref.shape[0]

    def conv3x3(a, m_ref, b_ref):
        """a: (H, W*Cin) f32 lane-dense activation -> (H, W*Cout) f32 + bias.

        Vertical taps: two XLU sublane rolls with the wrapped boundary row
        zeroed on the VPU. Horizontal taps + zero padding live inside the
        pre-packed banded weight matrix, so the whole conv is ONE bf16 MXU
        matmul (H, 3*W*Cin) @ (3*W*Cin, W*Cout) accumulated in f32.
        """
        lanes = a.shape[1]
        row = jax.lax.broadcasted_iota(jnp.int32, (h, lanes), 0)
        up = pltpu.roll(a, shift=1, axis=0)             # row y-1 (ky = 0)
        up = jnp.where(row == 0, jnp.zeros_like(up), up)
        dn = pltpu.roll(a, shift=h - 1, axis=0)         # row y+1 (ky = 2)
        dn = jnp.where(row == h - 1, jnp.zeros_like(dn), dn)
        big = jnp.concatenate([up, a, dn], axis=1).astype(jnp.bfloat16)
        acc = jnp.dot(big, m_ref[...], preferred_element_type=jnp.float32)
        return acc + b_ref[...]                          # (1, W*Cout) broadcast

    # ---- encoder: Conv3x3 -> ReLU -> Conv3x3 -------------------------------
    h1 = jnp.maximum(conv3x3(x_ref[...], m1_ref, b1_ref), 0.0)
    z = conv3x3(h1, m2_ref, b2_ref)

    # ---- quantization noise: z + 1/2**B * (rand*0.5 - 0.5), fused ----------
    z = z + noise_scale * (noise_ref[...] * 0.5 - 0.5)

    # ---- decoder: Conv3x3 -> ReLU -> Conv3x3, then sigmoid ------------------
    d1 = jnp.maximum(conv3x3(z, m3_ref, b3_ref), 0.0)
    y = conv3x3(d1, m4_ref, b4_ref)
    # sigmoid = 1 / (1 + exp(-y)): exp on the EUP, approx reciprocal on the EUP
    o_ref[...] = pl.reciprocal(1.0 + jnp.exp(-y), approx=True)


# ----------------------------------------------------------------------------
# Weight packing (hoisted out of the per-forward path).
# ----------------------------------------------------------------------------
def _band_matrix(size):
    """band[k, src, dst] = 1.0 iff src == dst + k - 1  (3-tap selector)."""
    idx = jnp.arange(size)
    k = jnp.arange(3)
    return (idx[None, :, None] == idx[None, None, :] + k[:, None, None] - 1
            ).astype(jnp.float32)


def pack_conv3x3(w, b, width, cin_pad=None, cout_pad=None):
    """Fold horizontal taps + padding of a (Cout, Cin, 3, 3) conv weight into
    one banded (3*W*Cin, W*Cout) bf16 matrix for the lane-dense (H, W*C)
    layout, with the three ky taps stacked along the contraction dim."""
    w = w.astype(jnp.float32)
    b = b.astype(jnp.float32)
    cout, cin = w.shape[0], w.shape[1]
    if cin_pad is not None and cin_pad > cin:
        w = jnp.pad(w, ((0, 0), (0, cin_pad - cin), (0, 0), (0, 0)))
        cin = cin_pad
    if cout_pad is not None and cout_pad > cout:
        w = jnp.pad(w, ((0, cout_pad - cout), (0, 0), (0, 0), (0, 0)))
        b = jnp.pad(b, ((0, cout_pad - cout),))
        cout = cout_pad
    band = _band_matrix(width)                      # (3, W, W): [kx, x_src, x_out]
    m = jnp.einsum("kax,oiyk->yaixo", band, w)      # (3, W, Cin, W, Cout)
    m = m.reshape(3 * width * cin, width * cout)    # ky taps stacked along K
    bias_row = jnp.tile(b, (width,)).reshape(1, width * cout)
    return m.astype(jnp.bfloat16), bias_row         # bias stays f32


def pack_params(params, width, c_pad=C_PAD):
    m1, b1 = pack_conv3x3(params["enc_w1"], params["enc_b1"], width, cin_pad=c_pad)
    m2, b2 = pack_conv3x3(params["enc_w2"], params["enc_b2"], width)
    m3, b3 = pack_conv3x3(params["dec_w1"], params["dec_b1"], width)
    m4, b4 = pack_conv3x3(params["dec_w2"], params["dec_b2"], width, cout_pad=c_pad)
    return {"m1": m1, "b1": b1, "m2": m2, "b2": b2,
            "m3": m3, "b3": b3, "m4": m4, "b4": b4}


# ----------------------------------------------------------------------------
# Forward wrapper: single fused pallas_call.
# ----------------------------------------------------------------------------
@functools.partial(jax.jit, static_argnames=("B",))
def autoencoder_forward(x_nchw, packed, noise_u, B=2):
    n, c_in, h, w = x_nchw.shape
    # NCHW (PyTorch) -> lane-dense (N, H, W*C_PAD), channels zero-padded to 8
    # so input/output slabs are exactly 128 lanes wide.
    x = jnp.transpose(x_nchw, (0, 2, 3, 1)).astype(jnp.float32)       # NHWC
    x = jnp.pad(x, ((0, 0), (0, 0), (0, 0), (0, C_PAD - c_in)))
    x = x.reshape(n, h, w * C_PAD)

    m1, b1, m2, b2 = packed["m1"], packed["b1"], packed["m2"], packed["b2"]
    m3, b3, m4, b4 = packed["m3"], packed["b3"], packed["m4"], packed["b4"]

    per_sample = lambda a: pl.BlockSpec((pl.Squeezed(),) + a.shape[1:],
                                        lambda i: (i, 0, 0))
    full2 = lambda a: pl.BlockSpec(a.shape, lambda i: (0, 0))

    y2d = pl.pallas_call(
        functools.partial(fused_ae_kernel, noise_scale=float(1.0 / 2 ** B)),
        out_shape=jax.ShapeDtypeStruct((n, h, w * C_PAD), jnp.float32),
        grid_spec=pltpu.PrefetchScalarGridSpec(
            num_scalar_prefetch=0,
            grid=(n,),
            in_specs=[
                per_sample(x),
                full2(m1), full2(b1), full2(m2), full2(b2),
                full2(m3), full2(b3), full2(m4), full2(b4),
                per_sample(noise_u),
            ],
            out_specs=pl.BlockSpec((pl.Squeezed(), h, w * C_PAD),
                                   lambda i: (i, 0, 0)),
        ),
        compiler_params=pltpu.CompilerParams(
            dimension_semantics=("parallel",)),
    )(x, m1, b1, m2, b2, m3, b3, m4, b4, noise_u)

    # lane-dense (N, H, W*C_PAD) -> drop padded channels -> NCHW
    y = y2d.reshape(n, h, w, C_PAD)[..., :c_in]
    return jnp.transpose(y, (0, 3, 1, 2))


# ----------------------------------------------------------------------------
# Pure-JAX f32 reference (for correctness checking only).
# ----------------------------------------------------------------------------
def reference_forward(x_nchw, params, noise_u, B=2):
    x = jnp.transpose(x_nchw, (0, 2, 3, 1)).astype(jnp.float32)   # NHWC

    def conv(h, w, b):
        out = jax.lax.conv_general_dilated(
            h, jnp.transpose(w, (2, 3, 1, 0)),                    # OIHW -> HWIO
            window_strides=(1, 1), padding="SAME",
            dimension_numbers=("NHWC", "HWIO", "NHWC"))
        return out + b

    h = jax.nn.relu(conv(x, params["enc_w1"], params["enc_b1"]))
    z = conv(h, params["enc_w2"], params["enc_b2"])
    n, hh, ww, cz = z.shape
    z = z + (1.0 / 2 ** B) * (noise_u.reshape(n, hh, ww, cz) * 0.5 - 0.5)
    d = jax.nn.relu(conv(z, params["dec_w1"], params["dec_b1"]))
    y = jax.nn.sigmoid(conv(d, params["dec_w2"], params["dec_b2"]))
    return jnp.transpose(y, (0, 3, 1, 2))


# ----------------------------------------------------------------------------
# Parameter init (deterministic synthetic weights).
# ----------------------------------------------------------------------------
def init_params(key, c_in=C_IN, c_hidden=C_HID, c_latent=C_LAT):
    ks = jax.random.split(key, 8)
    s = 0.1
    return {
        "enc_w1": jax.random.normal(ks[0], (c_hidden, c_in, 3, 3), jnp.float32) * s,
        "enc_b1": jax.random.normal(ks[1], (c_hidden,), jnp.float32) * s,
        "enc_w2": jax.random.normal(ks[2], (c_latent, c_hidden, 3, 3), jnp.float32) * s,
        "enc_b2": jax.random.normal(ks[3], (c_latent,), jnp.float32) * s,
        "dec_w1": jax.random.normal(ks[4], (c_hidden, c_latent, 3, 3), jnp.float32) * s,
        "dec_b1": jax.random.normal(ks[5], (c_hidden,), jnp.float32) * s,
        "dec_w2": jax.random.normal(ks[6], (c_in, c_hidden, 3, 3), jnp.float32) * s,
        "dec_b2": jax.random.normal(ks[7], (c_in,), jnp.float32) * s,
    }


if __name__ == "__main__":
    key = jax.random.PRNGKey(0)
    k_x, k_p, k_n = jax.random.split(key, 3)

    N, H, W = 2, 16, 16
    x = jax.random.normal(k_x, (N, C_IN, H, W), jnp.float32)        # NCHW like PyTorch
    params = init_params(k_p)
    packed = pack_params(params, width=W)                           # packed once, off the fwd path
    # Uniform [0,1) noise (matches torch.rand_like), lane-dense latent layout.
    noise_u = jax.random.uniform(k_n, (N, H, W * C_LAT), dtype=jnp.float32)

    y = autoencoder_forward(x, packed, noise_u, B=2)
    y = jax.block_until_ready(y)

    assert y.shape == (N, C_IN, H, W)
    assert bool(jnp.all((y > 0.0) & (y < 1.0)))                     # sigmoid range

    # Cross-check the fused bf16 kernel against a pure-f32 conv reference
    # (tolerance covers the bf16 MXU inputs + approx reciprocal).
    y_ref = reference_forward(x, params, noise_u, B=2)
    max_err = float(jnp.max(jnp.abs(y - y_ref)))
    assert max_err < 5e-3, f"max abs err {max_err}"

    print("KERNEL_OK")
</pallas_src>

<mosaic_0001>
module attributes {stable_mosaic.version = 11 : i64} {
  func.func @fused_ae_kernel(%arg0: i32, %arg1: memref<1x16x128xf32, #tpu.memory_space<vmem>>, %arg2: memref<384x128xbf16, #tpu.memory_space<vmem>>, %arg3: memref<1x128xf32, #tpu.memory_space<vmem>>, %arg4: memref<384x128xbf16, #tpu.memory_space<vmem>>, %arg5: memref<1x128xf32, #tpu.memory_space<vmem>>, %arg6: memref<384x128xbf16, #tpu.memory_space<vmem>>, %arg7: memref<1x128xf32, #tpu.memory_space<vmem>>, %arg8: memref<384x128xbf16, #tpu.memory_space<vmem>>, %arg9: memref<1x128xf32, #tpu.memory_space<vmem>>, %arg10: memref<1x16x128xf32, #tpu.memory_space<vmem>>, %arg11: memref<1x16x128xf32, #tpu.memory_space<vmem>>) attributes {dimension_semantics = [#tpu.dimension_semantics<parallel>], iteration_bounds = array<i64: 2>, scalar_prefetch = 0 : i64, scratch_operands = 0 : i64, tpu.core_type = #tpu.core_type<tc>, window_params = [{transform_indices = @transform_0, window_bounds = array<i64: 1, 16, 128>}, {pipeline_mode = #tpu.pipeline_mode<synchronous>, transform_indices = @transform_1, window_bounds = array<i64: 384, 128>}, {pipeline_mode = #tpu.pipeline_mode<synchronous>, transform_indices = @transform_2, window_bounds = array<i64: 1, 128>}, {pipeline_mode = #tpu.pipeline_mode<synchronous>, transform_indices = @transform_3, window_bounds = array<i64: 384, 128>}, {pipeline_mode = #tpu.pipeline_mode<synchronous>, transform_indices = @transform_4, window_bounds = array<i64: 1, 128>}, {pipeline_mode = #tpu.pipeline_mode<synchronous>, transform_indices = @transform_5, window_bounds = array<i64: 384, 128>}, {pipeline_mode = #tpu.pipeline_mode<synchronous>, transform_indices = @transform_6, window_bounds = array<i64: 1, 128>}, {pipeline_mode = #tpu.pipeline_mode<synchronous>, transform_indices = @transform_7, window_bounds = array<i64: 384, 128>}, {pipeline_mode = #tpu.pipeline_mode<synchronous>, transform_indices = @transform_8, window_bounds = array<i64: 1, 128>}, {transform_indices = @transform_9, window_bounds = array<i64: 1, 16, 128>}, {transform_indices = @transform_10, window_bounds = array<i64: 1, 16, 128>}]} {
    %c0 = arith.constant 0 : index
    %c0_0 = arith.constant 0 : index
    %c0_1 = arith.constant 0 : index
    %0 = vector.load %arg1[%c0, %c0_0, %c0_1] : memref<1x16x128xf32, #tpu.memory_space<vmem>>, vector<1x16x128xf32>
    %1 = vector.shape_cast %0 : vector<1x16x128xf32> to vector<16x128xf32>
    %2 = tpu.iota {dimensions = array<i32: 0>} : vector<16x128xi32>
    %c1_i32 = arith.constant 1 : i32
    %3 = tpu.dynamic_rotate %1 by %c1_i32 dim 0 : vector<16x128xf32>, i32 -> vector<16x128xf32>
    %c0_i32 = arith.constant 0 : i32
    %4 = vector.broadcast %c0_i32 : i32 to vector<16x128xi32>
    %5 = arith.cmpi eq, %2, %4 : vector<16x128xi32>
    %cst = arith.constant 0.000000e+00 : f32
    %6 = vector.broadcast %cst : f32 to vector<16x128xf32>
    %7 = arith.select %5, %6, %3 : vector<16x128xi1>, vector<16x128xf32>
    %c15_i32 = arith.constant 15 : i32
    %8 = tpu.dynamic_rotate %1 by %c15_i32 dim 0 : vector<16x128xf32>, i32 -> vector<16x128xf32>
    %c15_i32_2 = arith.constant 15 : i32
    %9 = vector.broadcast %c15_i32_2 : i32 to vector<16x128xi32>
    %10 = arith.cmpi eq, %2, %9 : vector<16x128xi32>
    %cst_3 = arith.constant 0.000000e+00 : f32
    %11 = vector.broadcast %cst_3 : f32 to vector<16x128xf32>
    %12 = arith.select %10, %11, %8 : vector<16x128xi1>, vector<16x128xf32>
    %13 = tpu.concatenate %7, %1, %12 in 1 : vector<16x128xf32>, vector<16x128xf32>, vector<16x128xf32> -> vector<16x384xf32>
    %14 = arith.truncf %13 : vector<16x384xf32> to vector<16x384xbf16>
    %c0_4 = arith.constant 0 : index
    %c0_5 = arith.constant 0 : index
    %15 = vector.load %arg2[%c0_4, %c0_5] : memref<384x128xbf16, #tpu.memory_space<vmem>>, vector<384x128xbf16>
    %cst_6 = arith.constant dense<0.000000e+00> : vector<16x128xf32>
    %16 = tpu.matmul %14, %15, %cst_6 {dimension_numbers = #tpu.dot_dimension_numbers<[1], [0], [0], [1], [0, 0, 1, 1], [], []>} : vector<16x384xbf16>, vector<384x128xbf16>, vector<16x128xf32> -> vector<16x128xf32>
    %c0_7 = arith.constant 0 : index
    %c0_8 = arith.constant 0 : index
    %17 = vector.load %arg3[%c0_7, %c0_8] : memref<1x128xf32, #tpu.memory_space<vmem>>, vector<1x128xf32>
    %18 = vector.broadcast %17 : vector<1x128xf32> to vector<16x128xf32>
    %19 = arith.addf %16, %18 : vector<16x128xf32>
    %cst_9 = arith.constant 0.000000e+00 : f32
    %20 = vector.broadcast %cst_9 : f32 to vector<16x128xf32>
    %21 = arith.maximumf %19, %20 : vector<16x128xf32>
    %22 = tpu.iota {dimensions = array<i32: 0>} : vector<16x128xi32>
    %c1_i32_10 = arith.constant 1 : i32
    %23 = tpu.dynamic_rotate %21 by %c1_i32_10 dim 0 : vector<16x128xf32>, i32 -> vector<16x128xf32>
    %c0_i32_11 = arith.constant 0 : i32
    %24 = vector.broadcast %c0_i32_11 : i32 to vector<16x128xi32>
    %25 = arith.cmpi eq, %22, %24 : vector<16x128xi32>
    %cst_12 = arith.constant 0.000000e+00 : f32
    %26 = vector.broadcast %cst_12 : f32 to vector<16x128xf32>
    %27 = arith.select %25, %26, %23 : vector<16x128xi1>, vector<16x128xf32>
    %c15_i32_13 = arith.constant 15 : i32
    %28 = tpu.dynamic_rotate %21 by %c15_i32_13 dim 0 : vector<16x128xf32>, i32 -> vector<16x128xf32>
    %c15_i32_14 = arith.constant 15 : i32
    %29 = vector.broadcast %c15_i32_14 : i32 to vector<16x128xi32>
    %30 = arith.cmpi eq, %22, %29 : vector<16x128xi32>
    %cst_15 = arith.constant 0.000000e+00 : f32
    %31 = vector.broadcast %cst_15 : f32 to vector<16x128xf32>
    %32 = arith.select %30, %31, %28 : vector<16x128xi1>, vector<16x128xf32>
    %33 = tpu.concatenate %27, %21, %32 in 1 : vector<16x128xf32>, vector<16x128xf32>, vector<16x128xf32> -> vector<16x384xf32>
    %34 = arith.truncf %33 : vector<16x384xf32> to vector<16x384xbf16>
    %c0_16 = arith.constant 0 : index
    %c0_17 = arith.constant 0 : index
    %35 = vector.load %arg4[%c0_16, %c0_17] : memref<384x128xbf16, #tpu.memory_space<vmem>>, vector<384x128xbf16>
    %cst_18 = arith.constant dense<0.000000e+00> : vector<16x128xf32>
    %36 = tpu.matmul %34, %35, %cst_18 {dimension_numbers = #tpu.dot_dimension_numbers<[1], [0], [0], [1], [0, 0, 1, 1], [], []>} : vector<16x384xbf16>, vector<384x128xbf16>, vector<16x128xf32> -> vector<16x128xf32>
    %c0_19 = arith.constant 0 : index
    %c0_20 = arith.constant 0 : index
    %37 = vector.load %arg5[%c0_19, %c0_20] : memref<1x128xf32, #tpu.memory_space<vmem>>, vector<1x128xf32>
    %38 = vector.broadcast %37 : vector<1x128xf32> to vector<16x128xf32>
    %39 = arith.addf %36, %38 : vector<16x128xf32>
    %c0_21 = arith.constant 0 : index
    %c0_22 = arith.constant 0 : index
    %c0_23 = arith.constant 0 : index
    %40 = vector.load %arg10[%c0_21, %c0_22, %c0_23] : memref<1x16x128xf32, #tpu.memory_space<vmem>>, vector<1x16x128xf32>
    %41 = vector.shape_cast %40 : vector<1x16x128xf32> to vector<16x128xf32>
    %cst_24 = arith.constant 5.000000e-01 : f32
    %42 = vector.broadcast %cst_24 : f32 to vector<16x128xf32>
    %43 = arith.mulf %41, %42 : vector<16x128xf32>
    %cst_25 = arith.constant 5.000000e-01 : f32
    %44 = vector.broadcast %cst_25 : f32 to vector<16x128xf32>
    %45 = arith.subf %43, %44 : vector<16x128xf32>
    %cst_26 = arith.constant 2.500000e-01 : f32
    %46 = vector.broadcast %cst_26 : f32 to vector<16x128xf32>
    %47 = arith.mulf %46, %45 : vector<16x128xf32>
    %48 = arith.addf %39, %47 : vector<16x128xf32>
    %49 = tpu.iota {dimensions = array<i32: 0>} : vector<16x128xi32>
    %c1_i32_27 = arith.constant 1 : i32
    %50 = tpu.dynamic_rotate %48 by %c1_i32_27 dim 0 : vector<16x128xf32>, i32 -> vector<16x128xf32>
    %c0_i32_28 = arith.constant 0 : i32
    %51 = vector.broadcast %c0_i32_28 : i32 to vector<16x128xi32>
    %52 = arith.cmpi eq, %49, %51 : vector<16x128xi32>
    %cst_29 = arith.constant 0.000000e+00 : f32
    %53 = vector.broadcast %cst_29 : f32 to vector<16x128xf32>
    %54 = arith.select %52, %53, %50 : vector<16x128xi1>, vector<16x128xf32>
    %c15_i32_30 = arith.constant 15 : i32
    %55 = tpu.dynamic_rotate %48 by %c15_i32_30 dim 0 : vector<16x128xf32>, i32 -> vector<16x128xf32>
    %c15_i32_31 = arith.constant 15 : i32
    %56 = vector.broadcast %c15_i32_31 : i32 to vector<16x128xi32>
    %57 = arith.cmpi eq, %49, %56 : vector<16x128xi32>
    %cst_32 = arith.constant 0.000000e+00 : f32
    %58 = vector.broadcast %cst_32 : f32 to vector<16x128xf32>
    %59 = arith.select %57, %58, %55 : vector<16x128xi1>, vector<16x128xf32>
    %60 = tpu.concatenate %54, %48, %59 in 1 : vector<16x128xf32>, vector<16x128xf32>, vector<16x128xf32> -> vector<16x384xf32>
    %61 = arith.truncf %60 : vector<16x384xf32> to vector<16x384xbf16>
    %c0_33 = arith.constant 0 : index
    %c0_34 = arith.constant 0 : index
    %62 = vector.load %arg6[%c0_33, %c0_34] : memref<384x128xbf16, #tpu.memory_space<vmem>>, vector<384x128xbf16>
    %cst_35 = arith.constant dense<0.000000e+00> : vector<16x128xf32>
    %63 = tpu.matmul %61, %62, %cst_35 {dimension_numbers = #tpu.dot_dimension_numbers<[1], [0], [0], [1], [0, 0, 1, 1], [], []>} : vector<16x384xbf16>, vector<384x128xbf16>, vector<16x128xf32> -> vector<16x128xf32>
    %c0_36 = arith.constant 0 : index
    %c0_37 = arith.constant 0 : index
    %64 = vector.load %arg7[%c0_36, %c0_37] : memref<1x128xf32, #tpu.memory_space<vmem>>, vector<1x128xf32>
    %65 = vector.broadcast %64 : vector<1x128xf32> to vector<16x128xf32>
    %66 = arith.addf %63, %65 : vector<16x128xf32>
    %cst_38 = arith.constant 0.000000e+00 : f32
    %67 = vector.broadcast %cst_38 : f32 to vector<16x128xf32>
    %68 = arith.maximumf %66, %67 : vector<16x128xf32>
    %69 = tpu.iota {dimensions = array<i32: 0>} : vector<16x128xi32>
    %c1_i32_39 = arith.constant 1 : i32
    %70 = tpu.dynamic_rotate %68 by %c1_i32_39 dim 0 : vector<16x128xf32>, i32 -> vector<16x128xf32>
    %c0_i32_40 = arith.constant 0 : i32
    %71 = vector.broadcast %c0_i32_40 : i32 to vector<16x128xi32>
    %72 = arith.cmpi eq, %69, %71 : vector<16x128xi32>
    %cst_41 = arith.constant 0.000000e+00 : f32
    %73 = vector.broadcast %cst_41 : f32 to vector<16x128xf32>
    %74 = arith.select %72, %73, %70 : vector<16x128xi1>, vector<16x128xf32>
    %c15_i32_42 = arith.constant 15 : i32
    %75 = tpu.dynamic_rotate %68 by %c15_i32_42 dim 0 : vector<16x128xf32>, i32 -> vector<16x128xf32>
    %c15_i32_43 = arith.constant 15 : i32
    %76 = vector.broadcast %c15_i32_43 : i32 to vector<16x128xi32>
    %77 = arith.cmpi eq, %69, %76 : vector<16x128xi32>
    %cst_44 = arith.constant 0.000000e+00 : f32
    %78 = vector.broadcast %cst_44 : f32 to vector<16x128xf32>
    %79 = arith.select %77, %78, %75 : vector<16x128xi1>, vector<16x128xf32>
    %80 = tpu.concatenate %74, %68, %79 in 1 : vector<16x128xf32>, vector<16x128xf32>, vector<16x128xf32> -> vector<16x384xf32>
    %81 = arith.truncf %80 : vector<16x384xf32> to vector<16x384xbf16>
    %c0_45 = arith.constant 0 : index
    %c0_46 = arith.constant 0 : index
    %82 = vector.load %arg8[%c0_45, %c0_46] : memref<384x128xbf16, #tpu.memory_space<vmem>>, vector<384x128xbf16>
    %cst_47 = arith.constant dense<0.000000e+00> : vector<16x128xf32>
    %83 = tpu.matmul %81, %82, %cst_47 {dimension_numbers = #tpu.dot_dimension_numbers<[1], [0], [0], [1], [0, 0, 1, 1], [], []>} : vector<16x384xbf16>, vector<384x128xbf16>, vector<16x128xf32> -> vector<16x128xf32>
    %c0_48 = arith.constant 0 : index
    %c0_49 = arith.constant 0 : index
    %84 = vector.load %arg9[%c0_48, %c0_49] : memref<1x128xf32, #tpu.memory_space<vmem>>, vector<1x128xf32>
    %85 = vector.broadcast %84 : vector<1x128xf32> to vector<16x128xf32>
    %86 = arith.addf %83, %85 : vector<16x128xf32>
    %cst_50 = arith.constant 0.000000e+00 : f32
    %87 = vector.broadcast %cst_50 : f32 to vector<16x128xf32>
    %88 = arith.subf %87, %86 : vector<16x128xf32>
    %89 = math.exp %88 : vector<16x128xf32>
    %cst_51 = arith.constant 1.000000e+00 : f32
    %90 = vector.broadcast %cst_51 : f32 to vector<16x128xf32>
    %91 = arith.addf %90, %89 : vector<16x128xf32>
    %92 = tpu.reciprocal %91 {approx = true} : vector<16x128xf32> -> vector<16x128xf32>
    %c0_52 = arith.constant 0 : index
    %c0_53 = arith.constant 0 : index
    %c0_54 = arith.constant 0 : index
    %93 = vector.load %arg11[%c0_52, %c0_53, %c0_54] : memref<1x16x128xf32, #tpu.memory_space<vmem>>, vector<1x16x128xf32>
    %94 = vector.shape_cast %93 : vector<1x16x128xf32> to vector<16x128xf32>
    %95 = vector.shape_cast %92 : vector<16x128xf32> to vector<1x16x128xf32>
    tpu.vector_store %arg11[%c0_52, %c0_53, %c0_54], %95 {strides = array<i32>} : memref<1x16x128xf32, #tpu.memory_space<vmem>>, vector<1x16x128xf32>,
    return
  }
  func.func @transform_0(%arg0: i32) -> (i32, i32, i32) {
    %c0_i32 = arith.constant 0 : i32
    %c0_i32_0 = arith.constant 0 : i32
    %c0_i32_1 = arith.constant 0 : i32
    return %arg0, %c0_i32, %c0_i32_0 : i32, i32, i32
  }
  func.func @transform_1(%arg0: i32) -> (i32, i32) {
    %c0_i32 = arith.constant 0 : i32
    %c0_i32_0 = arith.constant 0 : i32
    %c0_i32_1 = arith.constant 0 : i32
    return %c0_i32, %c0_i32_0 : i32, i32
  }
  func.func @transform_2(%arg0: i32) -> (i32, i32) {
    %c0_i32 = arith.constant 0 : i32
    %c0_i32_0 = arith.constant 0 : i32
    %c0_i32_1 = arith.constant 0 : i32
    return %c0_i32, %c0_i32_0 : i32, i32
  }
  func.func @transform_3(%arg0: i32) -> (i32, i32) {
    %c0_i32 = arith.constant 0 : i32
    %c0_i32_0 = arith.constant 0 : i32
    %c0_i32_1 = arith.constant 0 : i32
    return %c0_i32, %c0_i32_0 : i32, i32
  }
  func.func @transform_4(%arg0: i32) -> (i32, i32) {
    %c0_i32 = arith.constant 0 : i32
    %c0_i32_0 = arith.constant 0 : i32
    %c0_i32_1 = arith.constant 0 : i32
    return %c0_i32, %c0_i32_0 : i32, i32
  }
  func.func @transform_5(%arg0: i32) -> (i32, i32) {
    %c0_i32 = arith.constant 0 : i32
    %c0_i32_0 = arith.constant 0 : i32
    %c0_i32_1 = arith.constant 0 : i32
    return %c0_i32, %c0_i32_0 : i32, i32
  }
  func.func @transform_6(%arg0: i32) -> (i32, i32) {
    %c0_i32 = arith.constant 0 : i32
    %c0_i32_0 = arith.constant 0 : i32
    %c0_i32_1 = arith.constant 0 : i32
    return %c0_i32, %c0_i32_0 : i32, i32
  }
  func.func @transform_7(%arg0: i32) -> (i32, i32) {
    %c0_i32 = arith.constant 0 : i32
    %c0_i32_0 = arith.constant 0 : i32
    %c0_i32_1 = arith.constant 0 : i32
    return %c0_i32, %c0_i32_0 : i32, i32
  }
  func.func @transform_8(%arg0: i32) -> (i32, i32) {
    %c0_i32 = arith.constant 0 : i32
    %c0_i32_0 = arith.constant 0 : i32
    %c0_i32_1 = arith.constant 0 : i32
    return %c0_i32, %c0_i32_0 : i32, i32
  }
  func.func @transform_9(%arg0: i32) -> (i32, i32, i32) {
    %c0_i32 = arith.constant 0 : i32
    %c0_i32_0 = arith.constant 0 : i32
    %c0_i32_1 = arith.constant 0 : i32
    return %arg0, %c0_i32, %c0_i32_0 : i32, i32, i32
  }
  func.func @transform_10(%arg0: i32) -> (i32, i32, i32) {
    %c0_i32 = arith.constant 0 : i32
    %c0_i32_0 = arith.constant 0 : i32
    %c0_i32_1 = arith.constant 0 : i32
    return %arg0, %c0_i32, %c0_i32_0 : i32, i32, i32
  }
}

</mosaic_0001>

<llo_original>
// kernel: autoencoder_forward.1
$region0: #{autoencoder_forward.1}
  #allocation0 [shape = 'u32[]', space=smem, size = 0x4, offset = 0x4, fixed_abs, tag = 'smem constant byte address 0x4 - core index']
  #allocation1 [shape = 'u32[144,128]{1,0:T(1,128)}', space=vmem, size = 0x12000, scoped, tag = 'internal scratch']
  %s0 = inlined_call_operand.vmem [shape: f32[2,16,128], index: 0, kind: input, shape index: {}]
  %s1 = inlined_call_operand.vmem [shape: bf16[384,128], index: 1, kind: input, shape index: {}]
  %s2 = inlined_call_operand.vmem [shape: f32[1,128], index: 2, kind: input, shape index: {}]
  %s3 = inlined_call_operand.vmem [shape: bf16[384,128], index: 3, kind: input, shape index: {}]
  %s4 = inlined_call_operand.vmem [shape: f32[1,128], index: 4, kind: input, shape index: {}]
  %s5 = inlined_call_operand.vmem [shape: bf16[384,128], index: 5, kind: input, shape index: {}]
  %s6 = inlined_call_operand.vmem [shape: f32[1,128], index: 6, kind: input, shape index: {}]
  %s7 = inlined_call_operand.vmem [shape: bf16[384,128], index: 7, kind: input, shape index: {}]
  %s8 = inlined_call_operand.vmem [shape: f32[1,128], index: 8, kind: input, shape index: {}]
  %s9 = inlined_call_operand.vmem [shape: f32[2,16,128], index: 9, kind: input, shape index: {}]
  %s10 = inlined_call_operand.vmem [shape: f32[2,16,128], index: 10, kind: output, shape index: {}]
  %s11 = sld [smem:[#allocation0]]
  $region73: #{autoencoder_forward.1} parent=0
    _
  %s13 = ssub.s32 1, %s11
  %s14 = scalar_select 0, %s13, %s11
  loop: start=0, step=1, limit=4
  $region2: #{autoencoder_forward.1} parent=0 // loop_pre_header
    _
  $region3: #{autoencoder_forward.1} parent=0 // loop_header
    %s16 = sphi 0, %s20
    %p17 = scmp.ge.s32.totalorder %s16, 4
    %s26 = sphi 0, %s28
    %s29 = sphi 0, %s26
    %s30 = sphi 0, %s29
    %s46 = sphi 0, %s30
    %s50 = sphi 0, %s50
    %s52 = sphi 0, %s50
    %s53 = sphi 0, %s52
    %s67 = sphi 0, %s53
    %s71 = sphi 0, %s71
    %s73 = sphi 0, %s71
    %s74 = sphi 0, %s73
    %s88 = sphi 0, %s74
    %s92 = sphi 0, %s92
    %s94 = sphi 0, %s92
    %s95 = sphi 0, %s94
    %s109 = sphi 0, %s95
    %s113 = sphi 0, %s113
    %s115 = sphi 0, %s113
    %s116 = sphi 0, %s115
    %s130 = sphi 0, %s116
    %s134 = sphi 0, %s134
    %s136 = sphi 0, %s134
    %s137 = sphi 0, %s136
    %s151 = sphi 0, %s137
    %s155 = sphi 0, %s155
    %s157 = sphi 0, %s155
    %s158 = sphi 0, %s157
    %s172 = sphi 0, %s158
    %s176 = sphi 0, %s176
    %s178 = sphi 0, %s176
    %s179 = sphi 0, %s178
    %s193 = sphi 0, %s179
    %s197 = sphi 0, %s197
    %s199 = sphi 0, %s197
    %s200 = sphi 0, %s199
    %s214 = sphi 0, %s200
    %s220 = sphi 0, %s222
    %s223 = sphi 0, %s220
    %s224 = sphi 0, %s223
    %s240 = sphi 0, %s224
    %s246 = sphi 0, %s248
    %s249 = sphi 0, %s246
    %s250 = sphi 0, %s249
    %s266 = sphi 0, %s250
  $region4: #{autoencoder_forward.1} parent=0 // loop_header_branch
    %19 = sbr.rel (%p17) target = $region8
  $region5: #{autoencoder_forward.1} parent=0 // loop_body
    %s21 = ssub.s32 %s16, 1
    %s22 = ssub.s32 %s16, 2
    %s23 = sadd.s32 %s16, 1
    %s24 = ssub.s32 %s16, %s23
    %p25 = scmp.eq.s32.totalorder %s24, 0
    %s27 = sadd.s32 %s26, 1
    %s28 = scalar_select %p25, %s26, %s27
    %p31 = pneg %p25
    %p32 = scmp.eq.s32.totalorder %s16, 1
    %p33 = por %p31, %p32
    %p34 = scmp.ne.s32.totalorder %s26, %s29
    %p35 = scmp.eq.s32.totalorder %s16, 0
    %p36 = por %p34, %p35
    %p37 = scmp.ne.s32.totalorder %s26, %s29
    %p38 = scmp.eq.s32.totalorder %s21, 1
    %p39 = por %p37, %p38
    %p40 = scmp.ne.s32.totalorder %s29, %s30
    %p41 = scmp.eq.s32.totalorder %s21, 0
    %p42 = por %p40, %p41
    %p43 = scmp.ne.s32.totalorder %s29, %s30
    %p44 = scmp.eq.s32.totalorder %s22, 1
    %p45 = por %p43, %p44
    %p47 = scmp.ne.s32.totalorder %s30, %s46
    %p48 = scmp.eq.s32.totalorder %s22, 0
    %p49 = por %p47, %p48
    %s51 = sadd.s32 %s50, 1
    %p54 = scmp.eq.s32.totalorder %s16, 1
    %p55 = scmp.ne.s32.totalorder %s50, %s52
    %p56 = scmp.eq.s32.totalorder %s16, 0
    %p57 = por %p55, %p56
    %p58 = scmp.ne.s32.totalorder %s50, %s52
    %p59 = scmp.eq.s32.totalorder %s21, 1
    %p60 = por %p58, %p59
    %p61 = scmp.ne.s32.totalorder %s52, %s53
    %p62 = scmp.eq.s32.totalorder %s21, 0
    %p63 = por %p61, %p62
    %p64 = scmp.ne.s32.totalorder %s52, %s53
    %p65 = scmp.eq.s32.totalorder %s22, 1
    %p66 = por %p64, %p65
    %p68 = scmp.ne.s32.totalorder %s53, %s67
    %p69 = scmp.eq.s32.totalorder %s22, 0
    %p70 = por %p68, %p69
    %s72 = sadd.s32 %s71, 1
    %p75 = scmp.eq.s32.totalorder %s16, 1
    %p76 = scmp.ne.s32.totalorder %s71, %s73
    %p77 = scmp.eq.s32.totalorder %s16, 0
    %p78 = por %p76, %p77
    %p79 = scmp.ne.s32.totalorder %s71, %s73
    %p80 = scmp.eq.s32.totalorder %s21, 1
    %p81 = por %p79, %p80
    %p82 = scmp.ne.s32.totalorder %s73, %s74
    %p83 = scmp.eq.s32.totalorder %s21, 0
    %p84 = por %p82, %p83
    %p85 = scmp.ne.s32.totalorder %s73, %s74
    %p86 = scmp.eq.s32.totalorder %s22, 1
    %p87 = por %p85, %p86
    %p89 = scmp.ne.s32.totalorder %s74, %s88
    %p90 = scmp.eq.s32.totalorder %s22, 0
    %p91 = por %p89, %p90
    %s93 = sadd.s32 %s92, 1
    %p96 = scmp.eq.s32.totalorder %s16, 1
    %p97 = scmp.ne.s32.totalorder %s92, %s94
    %p98 = scmp.eq.s32.totalorder %s16, 0
    %p99 = por %p97, %p98
    %p100 = scmp.ne.s32.totalorder %s92, %s94
    %p101 = scmp.eq.s32.totalorder %s21, 1
    %p102 = por %p100, %p101
    %p103 = scmp.ne.s32.totalorder %s94, %s95
    %p104 = scmp.eq.s32.totalorder %s21, 0
    %p105 = por %p103, %p104
    %p106 = scmp.ne.s32.totalorder %s94, %s95
    %p107 = scmp.eq.s32.totalorder %s22, 1
    %p108 = por %p106, %p107
    %p110 = scmp.ne.s32.totalorder %s95, %s109
    %p111 = scmp.eq.s32.totalorder %s22, 0
    %p112 = por %p110, %p111
    %s114 = sadd.s32 %s113, 1
    %p117 = scmp.eq.s32.totalorder %s16, 1
    %p118 = scmp.ne.s32.totalorder %s113, %s115
    %p119 = scmp.eq.s32.totalorder %s16, 0
    %p120 = por %p118, %p119
    %p121 = scmp.ne.s32.totalorder %s113, %s115
    %p122 = scmp.eq.s32.totalorder %s21, 1
    %p123 = por %p121, %p122
    %p124 = scmp.ne.s32.totalorder %s115, %s116
    %p125 = scmp.eq.s32.totalorder %s21, 0
    %p126 = por %p124, %p125
    %p127 = scmp.ne.s32.totalorder %s115, %s116
    %p128 = scmp.eq.s32.totalorder %s22, 1
    %p129 = por %p127, %p128
    %p131 = scmp.ne.s32.totalorder %s116, %s130
    %p132 = scmp.eq.s32.totalorder %s22, 0
    %p133 = por %p131, %p132
    %s135 = sadd.s32 %s134, 1
    %p138 = scmp.eq.s32.totalorder %s16, 1
    %p139 = scmp.ne.s32.totalorder %s134, %s136
    %p140 = scmp.eq.s32.totalorder %s16, 0
    %p141 = por %p139, %p140
    %p142 = scmp.ne.s32.totalorder %s134, %s136
    %p143 = scmp.eq.s32.totalorder %s21, 1
    %p144 = por %p142, %p143
    %p145 = scmp.ne.s32.totalorder %s136, %s137
    %p146 = scmp.eq.s32.totalorder %s21, 0
    %p147 = por %p145, %p146
    %p148 = scmp.ne.s32.totalorder %s136, %s137
    %p149 = scmp.eq.s32.totalorder %s22, 1
    %p150 = por %p148, %p149
    %p152 = scmp.ne.s32.totalorder %s137, %s151
    %p153 = scmp.eq.s32.totalorder %s22, 0
    %p154 = por %p152, %p153
    %s156 = sadd.s32 %s155, 1
    %p159 = scmp.eq.s32.totalorder %s16, 1
    %p160 = scmp.ne.s32.totalorder %s155, %s157
    %p161 = scmp.eq.s32.totalorder %s16, 0
    %p162 = por %p160, %p161
    %p163 = scmp.ne.s32.totalorder %s155, %s157
    %p164 = scmp.eq.s32.totalorder %s21, 1
    %p165 = por %p163, %p164
    %p166 = scmp.ne.s32.totalorder %s157, %s158
    %p167 = scmp.eq.s32.totalorder %s21, 0
    %p168 = por %p166, %p167
    %p169 = scmp.ne.s32.totalorder %s157, %s158
    %p170 = scmp.eq.s32.totalorder %s22, 1
    %p171 = por %p169, %p170
    %p173 = scmp.ne.s32.totalorder %s158, %s172
    %p174 = scmp.eq.s32.totalorder %s22, 0
    %p175 = por %p173, %p174
    %s177 = sadd.s32 %s176, 1
    %p180 = scmp.eq.s32.totalorder %s16, 1
    %p181 = scmp.ne.s32.totalorder %s176, %s178
    %p182 = scmp.eq.s32.totalorder %s16, 0
    %p183 = por %p181, %p182
    %p184 = scmp.ne.s32.totalorder %s176, %s178
    %p185 = scmp.eq.s32.totalorder %s21, 1
    %p186 = por %p184, %p185
    %p187 = scmp.ne.s32.totalorder %s178, %s179
    %p188 = scmp.eq.s32.totalorder %s21, 0
    %p189 = por %p187, %p188
    %p190 = scmp.ne.s32.totalorder %s178, %s179
    %p191 = scmp.eq.s32.totalorder %s22, 1
    %p192 = por %p190, %p191
    %p194 = scmp.ne.s32.totalorder %s179, %s193
    %p195 = scmp.eq.s32.totalorder %s22, 0
    %p196 = por %p194, %p195
    %s198 = sadd.s32 %s197, 1
    %p201 = scmp.eq.s32.totalorder %s16, 1
    %p202 = scmp.ne.s32.totalorder %s197, %s199
    %p203 = scmp.eq.s32.totalorder %s16, 0
    %p204 = por %p202, %p203
    %p205 = scmp.ne.s32.totalorder %s197, %s199
    %p206 = scmp.eq.s32.totalorder %s21, 1
    %p207 = por %p205, %p206
    %p208 = scmp.ne.s32.totalorder %s199, %s200
    %p209 = scmp.eq.s32.totalorder %s21, 0
    %p210 = por %p208, %p209
    %p211 = scmp.ne.s32.totalorder %s199, %s200
    %p212 = scmp.eq.s32.totalorder %s22, 1
    %p213 = por %p211, %p212
    %p215 = scmp.ne.s32.totalorder %s200, %s214
    %p216 = scmp.eq.s32.totalorder %s22, 0
    %p217 = por %p215, %p216
    %s218 = ssub.s32 %s16, %s23
    %p219 = scmp.eq.s32.totalorder %s218, 0
    %s221 = sadd.s32 %s220, 1
    %s222 = scalar_select %p219, %s220, %s221
    %p225 = pneg %p219
    %p226 = scmp.eq.s32.totalorder %s16, 1
    %p227 = por %p225, %p226
    %p228 = scmp.ne.s32.totalorder %s220, %s223
    %p229 = scmp.eq.s32.totalorder %s16, 0
    %p230 = por %p228, %p229
    %p231 = scmp.ne.s32.totalorder %s220, %s223
    %p232 = scmp.eq.s32.totalorder %s21, 1
    %p233 = por %p231, %p232
    %p234 = scmp.ne.s32.totalorder %s223, %s224
    %p235 = scmp.eq.s32.totalorder %s21, 0
    %p236 = por %p234, %p235
    %p237 = scmp.ne.s32.totalorder %s223, %s224
    %p238 = scmp.eq.s32.totalorder %s22, 1
    %p239 = por %p237, %p238
    %p241 = scmp.ne.s32.totalorder %s224, %s240
    %p242 = scmp.eq.s32.totalorder %s22, 0
    %p243 = por %p241, %p242
    %s244 = ssub.s32 %s16, %s23
    %p245 = scmp.eq.s32.totalorder %s244, 0
    %s247 = sadd.s32 %s246, 1
    %s248 = scalar_select %p245, %s246, %s247
    %p251 = pneg %p245
    %p252 = scmp.eq.s32.totalorder %s16, 1
    %p253 = por %p251, %p252
    %p254 = scmp.ne.s32.totalorder %s246, %s249
    %p255 = scmp.eq.s32.totalorder %s16, 0
    %p256 = por %p254, %p255
    %p257 = scmp.ne.s32.totalorder %s246, %s249
    %p258 = scmp.eq.s32.totalorder %s21, 1
    %p259 = por %p257, %p258
    %p260 = scmp.ne.s32.totalorder %s249, %s250
    %p261 = scmp.eq.s32.totalorder %s21, 0
    %p262 = por %p260, %p261
    %p263 = scmp.ne.s32.totalorder %s249, %s250
    %p264 = scmp.eq.s32.totalorder %s22, 1
    %p265 = por %p263, %p264
    %p267 = scmp.ne.s32.totalorder %s250, %s266
    %p268 = scmp.eq.s32.totalorder %s22, 0
    %p269 = por %p267, %p268
    %p270 = scmp.le.s32.totalorder 1, %s16
    %p271 = scmp.lt.s32.totalorder %s16, 3
    %p272 = pnand %p270, %p271
    %p273 = pneg %p272
    // Predicated region
    $region9: #{autoencoder_forward.1} parent=5 // pred_check
      _
    $region10: #{autoencoder_forward.1} parent=5 // pred_check_branch
      %275 = sbr.rel (%p272) target = $region12
    $region11: #{autoencoder_forward.1} parent=5 // pred_region
      %s276 = ssub.s32 %s16, 1
      // Predicated region
      $region13: #{autoencoder_forward.1} parent=11 // pred_check
        %p277 = pneg %p63
      $region14: #{autoencoder_forward.1} parent=11 // pred_check_branch
        %279 = sbr.rel (%p277) target = $region16
      $region15: #{autoencoder_forward.1} parent=11 // pred_region
        _
      $region16: #{autoencoder_forward.1} parent=11 // pred_fallthru
        _
      // Predicated region
      $region17: #{autoencoder_forward.1} parent=11 // pred_check
        %p280 = pneg %p84
      $region18: #{autoencoder_forward.1} parent=11 // pred_check_branch
        %282 = sbr.rel (%p280) target = $region20
      $region19: #{autoencoder_forward.1} parent=11 // pred_region
        _
      $region20: #{autoencoder_forward.1} parent=11 // pred_fallthru
        _
      // Predicated region
      $region21: #{autoencoder_forward.1} parent=11 // pred_check
        %p283 = pneg %p105
      $region22: #{autoencoder_forward.1} parent=11 // pred_check_branch
        %285 = sbr.rel (%p283) target = $region24
      $region23: #{autoencoder_forward.1} parent=11 // pred_region
        _
      $region24: #{autoencoder_forward.1} parent=11 // pred_fallthru
        _
      // Predicated region
      $region25: #{autoencoder_forward.1} parent=11 // pred_check
        %p286 = pneg %p126
      $region26: #{autoencoder_forward.1} parent=11 // pred_check_branch
        %288 = sbr.rel (%p286) target = $region28
      $region27: #{autoencoder_forward.1} parent=11 // pred_region
        _
      $region28: #{autoencoder_forward.1} parent=11 // pred_fallthru
        _
      // Predicated region
      $region29: #{autoencoder_forward.1} parent=11 // pred_check
        %p289 = pneg %p147
      $region30: #{autoencoder_forward.1} parent=11 // pred_check_branch
        %291 = sbr.rel (%p289) target = $region32
      $region31: #{autoencoder_forward.1} parent=11 // pred_region
        _
      $region32: #{autoencoder_forward.1} parent=11 // pred_fallthru
        _
      // Predicated region
      $region33: #{autoencoder_forward.1} parent=11 // pred_check
        %p292 = pneg %p168
      $region34: #{autoencoder_forward.1} parent=11 // pred_check_branch
        %294 = sbr.rel (%p292) target = $region36
      $region35: #{autoencoder_forward.1} parent=11 // pred_region
        _
      $region36: #{autoencoder_forward.1} parent=11 // pred_fallthru
        _
      // Predicated region
      $region37: #{autoencoder_forward.1} parent=11 // pred_check
        %p295 = pneg %p189
      $region38: #{autoencoder_forward.1} parent=11 // pred_check_branch
        %297 = sbr.rel (%p295) target = $region40
      $region39: #{autoencoder_forward.1} parent=11 // pred_region
        _
      $region40: #{autoencoder_forward.1} parent=11 // pred_fallthru
        _
      // Predicated region
      $region41: #{autoencoder_forward.1} parent=11 // pred_check
        %p298 = pneg %p210
      $region42: #{autoencoder_forward.1} parent=11 // pred_check_branch
        %300 = sbr.rel (%p298) target = $region44
      $region43: #{autoencoder_forward.1} parent=11 // pred_region
        _
      $region44: #{autoencoder_forward.1} parent=11 // pred_fallthru
        _
    $region12: #{autoencoder_forward.1} parent=5 // pred_fallthru
      _
    %p301 = scmp.lt.s32.totalorder %s16, 2
    // Predicated region
    $region45: #{autoencoder_forward.1} parent=5 // pred_check
      %p302 = pneg %p301
    $region46: #{autoencoder_forward.1} parent=5 // pred_check_branch
      %304 = sbr.rel (%p302) target = $region48
    $region47: #{autoencoder_forward.1} parent=5 // pred_region
      // Predicated region
      $region49: #{autoencoder_forward.1} parent=47 // pred_check
        %p305 = pneg %p36
      $region50: #{autoencoder_forward.1} parent=47 // pred_check_branch
        %307 = sbr.rel (%p305) target = $region52
      $region51: #{autoencoder_forward.1} parent=47 // pred_region
        %p308 = scmp.lt.s32.totalorder %s16, 1
        %s309 = scalar_select %p308, %s16, 1
        %s310 = smul.addr %s309, 2
        %s311 = smul.addr %s310, 8
        %s312 = scalar_lea.vmem %s0, %s311
      $region52: #{autoencoder_forward.1} parent=47 // pred_fallthru
        _
      // Predicated region
      $region53: #{autoencoder_forward.1} parent=47 // pred_check
        %p313 = pneg %p230
      $region54: #{autoencoder_forward.1} parent=47 // pred_check_branch
        %315 = sbr.rel (%p313) target = $region56
      $region55: #{autoencoder_forward.1} parent=47 // pred_region
        %p316 = scmp.lt.s32.totalorder %s16, 1
        %s317 = scalar_select %p316, %s16, 1
        %s318 = smul.addr %s317, 2
        %s319 = smul.addr %s318, 8
        %s320 = scalar_lea.vmem %s9, %s319
      $region56: #{autoencoder_forward.1} parent=47 // pred_fallthru
        _
    $region48: #{autoencoder_forward.1} parent=5 // pred_fallthru
      _
    %p321 = scmp.le.s32.totalorder 1, %s16
    %p322 = scmp.lt.s32.totalorder %s16, 3
    %p323 = pnand %p321, %p322
    %p324 = pneg %p323
    // Predicated region
    $region57: #{autoencoder_forward.1} parent=5 // pred_check
      _
    $region58: #{autoencoder_forward.1} parent=5 // pred_check_branch
      %326 = sbr.rel (%p323) target = $region60
    $region59: #{autoencoder_forward.1} parent=5 // pred_region
      %s327 = ssub.s32 %s16, 1
      %p328 = scmp.lt.s32.totalorder %s21, 1
      %s329 = scalar_select %p328, %s21, 1
      %s330 = smul.addr %s329, 2
      %s331 = smul.addr %s330, 8
      %s332 = scalar_lea.vmem %s0, %s331
      %p333 = pneg %p42
      %p334 = pneg %p39
      %p335 = pneg %p63
      %p336 = pneg %p60
      %p337 = pneg %p84
      %p338 = pneg %p81
      %p339 = pneg %p105
      %p340 = pneg %p102
      %p341 = pneg %p126
      %p342 = pneg %p123
      %p343 = pneg %p147
      %p344 = pneg %p144
      %p345 = pneg %p168
      %p346 = pneg %p165
      %p347 = pneg %p189
      %p348 = pneg %p186
      %p349 = pneg %p210
      %p350 = pneg %p207
      %p351 = scmp.lt.s32.totalorder %s21, 1
      %s352 = scalar_select %p351, %s21, 1
      %s353 = smul.addr %s352, 2
      %s354 = smul.addr %s353, 8
      %s355 = scalar_lea.vmem %s9, %s354
      %p356 = pneg %p236
      %p357 = pneg %p233
      %p358 = pneg %p262
      %p359 = pneg %p259
      %p360 = scmp.lt.s32.totalorder %s21, 1
      %s361 = scalar_select %p360, %s21, 1
      %s362 = smul.addr %s361, 2
      %s363 = smul.addr %s362, 8
      %s364 = scalar_lea.vmem %s10, %s363
      %p365 = scmp.lt.s32.totalorder %s21, 1
      %s366 = scalar_select %p365, %s21, 1
      %s367 = smul.addr %s366, 2
      %s368 = smul.addr %s367, 8
      %s369 = scalar_lea.vmem %s0, %s368
      %p370 = scmp.lt.s32.totalorder %s21, 1
      %s371 = scalar_select %p370, %s21, 1
      %s372 = smul.addr %s371, 2
      %s373 = smul.addr %s372, 8
      %s374 = scalar_lea.vmem %s9, %s373
      %p375 = scmp.lt.s32.totalorder %s21, 1
      %s376 = scalar_select %p375, %s21, 1
      %s377 = smul.addr %s376, 2
      %s378 = smul.addr %s377, 8
      %s379 = scalar_lea.vmem %s10, %s378
      %v381 = vld [vmem:[%s369] sm:$0xff]
      %v382 = vld [vmem:[%s369 + $0x8] sm:$0xff]
      %v383 = vlaneseq
      %v384 = vshrl.u32 %v383, 7
      %v385 = vadd.s32 %v384, 8
      %v386 = vrot.slane %v381, 7
      %v387 = vrot.slane %v382, 7
      %vm388 = vcmp.lt.s32.totalorder %v384, 1
      %v389 = vsel %vm388, %v386, %v387
      %v390 = vsel %vm388, %v387, %v386
      %vm391 = vcmp.eq.s32.totalorder %v384, 0
      %vm392 = vcmp.eq.s32.totalorder %v385, 0
      %v393 = vsel %vm391, 0.0, %v390
      %v394 = vsel %vm392, 0.0, %v389
      %v395 = vrot.slane %v381, 1
      %v396 = vrot.slane %v382, 1
      %vm397 = vcmp.lt.s32.totalorder %v384, 7
      %v398 = vsel %vm397, %v395, %v396
      %v399 = vsel %vm397, %v396, %v395
      %vm400 = vcmp.eq.s32.totalorder %v384, 15
      %vm401 = vcmp.eq.s32.totalorder %v385, 15
      %v402 = vsel %vm400, 0.0, %v398
      %v403 = vsel %vm401, 0.0, %v399
      %v404 = vpack.c.bf16 %v394, %v393
      %v405 = vpack.c.bf16 %v382, %v381
      %v406 = vpack.c.bf16 %v403, %v402
      %v407 = vld [vmem:[%s1] sm:$0xf]
      %v408 = vld [vmem:[%s1 + $0x4] sm:$0xf]
      %v409 = vld [vmem:[%s1 + $0x8] sm:$0xf]
      %v410 = vld [vmem:[%s1 + $0xc] sm:$0xf]
      %v411 = vld [vmem:[%s1 + $0x10] sm:$0xf]
      %v412 = vld [vmem:[%s1 + $0x14] sm:$0xf]
      %v413 = vld [vmem:[%s1 + $0x18] sm:$0xf]
      %v414 = vld [vmem:[%s1 + $0x1c] sm:$0xf]
      %v415 = vld [vmem:[%s1 + $0x20] sm:$0xf]
      %v416 = vld [vmem:[%s1 + $0x24] sm:$0xf]
      %v417 = vld [vmem:[%s1 + $0x28] sm:$0xf]
      %v418 = vld [vmem:[%s1 + $0x2c] sm:$0xf]
      %v419 = vld [vmem:[%s1 + $0x30] sm:$0xf]
      %v420 = vld [vmem:[%s1 + $0x34] sm:$0xf]
      %v421 = vld [vmem:[%s1 + $0x38] sm:$0xf]
      %v422 = vld [vmem:[%s1 + $0x3c] sm:$0xf]
      %v423 = vld [vmem:[%s1 + $0x40] sm:$0xf]
      %v424 = vld [vmem:[%s1 + $0x44] sm:$0xf]
      %v425 = vld [vmem:[%s1 + $0x48] sm:$0xf]
      %v426 = vld [vmem:[%s1 + $0x4c] sm:$0xf]
      %v427 = vld [vmem:[%s1 + $0x50] sm:$0xf]
      %v428 = vld [vmem:[%s1 + $0x54] sm:$0xf]
      %v429 = vld [vmem:[%s1 + $0x58] sm:$0xf]
      %v430 = vld [vmem:[%s1 + $0x5c] sm:$0xf]
      %v431 = vld [vmem:[%s1 + $0x60] sm:$0xf]
      %v432 = vld [vmem:[%s1 + $0x64] sm:$0xf]
      %v433 = vld [vmem:[%s1 + $0x68] sm:$0xf]
      %v434 = vld [vmem:[%s1 + $0x6c] sm:$0xf]
      %v435 = vld [vmem:[%s1 + $0x70] sm:$0xf]
      %v436 = vld [vmem:[%s1 + $0x74] sm:$0xf]
      %v437 = vld [vmem:[%s1 + $0x78] sm:$0xf]
      %v438 = vld [vmem:[%s1 + $0x7c] sm:$0xf]
      %v439 = vld [vmem:[%s1 + $0x80] sm:$0xf]
      %v440 = vld [vmem:[%s1 + $0x84] sm:$0xf]
      %v441 = vld [vmem:[%s1 + $0x88] sm:$0xf]
      %v442 = vld [vmem:[%s1 + $0x8c] sm:$0xf]
      %v443 = vld [vmem:[%s1 + $0x90] sm:$0xf]
      %v444 = vld [vmem:[%s1 + $0x94] sm:$0xf]
      %v445 = vld [vmem:[%s1 + $0x98] sm:$0xf]
      %v446 = vld [vmem:[%s1 + $0x9c] sm:$0xf]
      %v447 = vld [vmem:[%s1 + $0xa0] sm:$0xf]
      %v448 = vld [vmem:[%s1 + $0xa4] sm:$0xf]
      %v449 = vld [vmem:[%s1 + $0xa8] sm:$0xf]
      %v450 = vld [vmem:[%s1 + $0xac] sm:$0xf]
      %v451 = vld [vmem:[%s1 + $0xb0] sm:$0xf]
      %v452 = vld [vmem:[%s1 + $0xb4] sm:$0xf]
      %v453 = vld [vmem:[%s1 + $0xb8] sm:$0xf]
      %v454 = vld [vmem:[%s1 + $0xbc] sm:$0xf]
      %v455 = vld [vmem:[%s2] sm:$0x1]
      %v457 = vlaneseq
      %v458 = vshrl.u32 %v457, 7
      %v459 = vsub.s32 0, %v458
      %v460 = vrot.slane %v455, %v459
      %v510 = vunpack.c.l.b16 %v407
      %v511 = vunpack.c.l.b16 %v408
      %v512 = vunpack.c.l.b16 %v409
      %v513 = vunpack.c.l.b16 %v410
      %v514 = vunpack.c.l.b16 %v411
      %v515 = vunpack.c.l.b16 %v412
      %v516 = vunpack.c.l.b16 %v413
      %v517 = vunpack.c.l.b16 %v414
      %v518 = vunpack.c.l.b16 %v415
      %v519 = vunpack.c.l.b16 %v416
      %v520 = vunpack.c.l.b16 %v417
      %v521 = vunpack.c.l.b16 %v418
      %v522 = vunpack.c.l.b16 %v419
      %v523 = vunpack.c.l.b16 %v420
      %v524 = vunpack.c.l.b16 %v421
      %v525 = vunpack.c.l.b16 %v422
      %v526 = vunpack.c.l.b16 %v423
      %v527 = vunpack.c.l.b16 %v424
      %v528 = vunpack.c.l.b16 %v425
      %v529 = vunpack.c.l.b16 %v426
      %v530 = vunpack.c.l.b16 %v427
      %v531 = vunpack.c.l.b16 %v428
      %v532 = vunpack.c.l.b16 %v429
      %v533 = vunpack.c.l.b16 %v430
      %v534 = vunpack.c.l.b16 %v431
      %v535 = vunpack.c.l.b16 %v432
      %v536 = vunpack.c.l.b16 %v433
      %v537 = vunpack.c.l.b16 %v434
      %v538 = vunpack.c.l.b16 %v435
      %v539 = vunpack.c.l.b16 %v436
      %v540 = vunpack.c.l.b16 %v437
      %v541 = vunpack.c.l.b16 %v438
      %v542 = vunpack.c.l.b16 %v439
      %v543 = vunpack.c.l.b16 %v440
      %v544 = vunpack.c.l.b16 %v441
      %v545 = vunpack.c.l.b16 %v442
      %v546 = vunpack.c.l.b16 %v443
      %v547 = vunpack.c.l.b16 %v444
      %v548 = vunpack.c.l.b16 %v445
      %v549 = vunpack.c.l.b16 %v446
      %v550 = vunpack.c.l.b16 %v447
      %v551 = vunpack.c.l.b16 %v448
      %v552 = vunpack.c.l.b16 %v449
      %v553 = vunpack.c.l.b16 %v450
      %v554 = vunpack.c.l.b16 %v451
      %v555 = vunpack.c.l.b16 %v452
      %v556 = vunpack.c.l.b16 %v453
      %v557 = vunpack.c.l.b16 %v454
      %v558 = vpack.c.b16 %v511, %v510
      %v559 = vpack.c.b16 %v513, %v512
      %v560 = vpack.c.b16 %v515, %v514
      %v561 = vpack.c.b16 %v517, %v516
      %v562 = vpack.c.b16 %v519, %v518
      %v563 = vpack.c.b16 %v521, %v520
      %v564 = vpack.c.b16 %v523, %v522
      %v565 = vpack.c.b16 %v525, %v524
      %v566 = vpack.c.b16 %v527, %v526
      %v567 = vpack.c.b16 %v529, %v528
      %v568 = vpack.c.b16 %v531, %v530
      %v569 = vpack.c.b16 %v533, %v532
      %v570 = vpack.c.b16 %v535, %v534
      %v571 = vpack.c.b16 %v537, %v536
      %v572 = vpack.c.b16 %v539, %v538
      %v573 = vpack.c.b16 %v541, %v540
      %v574 = vpack.c.b16 %v543, %v542
      %v575 = vpack.c.b16 %v545, %v544
      %v576 = vpack.c.b16 %v547, %v546
      %v577 = vpack.c.b16 %v549, %v548
      %v578 = vpack.c.b16 %v551, %v550
      %v579 = vpack.c.b16 %v553, %v552
      %v580 = vpack.c.b16 %v555, %v554
      %v581 = vpack.c.b16 %v557, %v556
      %606 = vmatprep.subr.bf16.mxu0 0
      %607 = vmatpush1.bf16.msra.mxu0 %v558
      %608 = vmatprep.subr.bf16.mxu0 0
      %609 = vmatpush1.bf16.msra.mxu0 %v559
      %610 = vmatprep.subr.bf16.mxu0 0
      %611 = vmatpush1.bf16.msra.mxu0 %v560
      %612 = vmatprep.subr.bf16.mxu0 0
      %613 = vmatpush1.bf16.msra.mxu0 %v561
      %614 = vmatprep.subr.bf16.mxu0 0
      %615 = vmatpush1.bf16.msra.mxu0 %v562
      %616 = vmatprep.subr.bf16.mxu0 0
      %617 = vmatpush1.bf16.msra.mxu0 %v563
      %618 = vmatprep.subr.bf16.mxu0 0
      %619 = vmatpush1.bf16.msra.mxu0 %v564
      %620 = vmatprep.subr.bf16.mxu0 0
      %621 = vmatpush1.bf16.msra.mxu0 %v565
      %622 = vmatprep.subr.bf16.mxu0 0
      %623 = vmatpush1.bf16.msra.mxu0 %v566
      %624 = vmatprep.subr.bf16.mxu0 0
      %625 = vmatpush1.bf16.msra.mxu0 %v567
      %626 = vmatprep.subr.bf16.mxu0 0
      %627 = vmatpush1.bf16.msra.mxu0 %v568
      %628 = vmatprep.subr.bf16.mxu0 0
      %629 = vmatpush1.bf16.msra.mxu0 %v569
      %630 = vmatprep.subr.bf16.mxu0 0
      %631 = vmatpush1.bf16.msra.mxu0 %v570
      %632 = vmatprep.subr.bf16.mxu0 0
      %633 = vmatpush1.bf16.msra.mxu0 %v571
      %634 = vmatprep.subr.bf16.mxu0 0
      %635 = vmatpush1.bf16.msra.mxu0 %v572
      %636 = vmatprep.subr.bf16.mxu0 0
      %637 = vmatpush1.bf16.msra.mxu0 %v573
      %638 = vmatprep.mubr.bf16.mxu0 %v405
      %639 = vmatmul.mubr.bf16.gmra.mrb[0].mxu0 %v404
      %v640 = vpop.f32.mrb[0].mxu0
      %v641 = vadd.f32 %v460, %v640
      %v642 = vpop.f32.mrb[0].mxu0
      %v643 = vpop.f32.mrb[0].mxu0
      %v644 = vadd.f32 %v460, %v643
      %v645 = vpop.f32.mrb[0].mxu0
      %646 = vdwg.mxu0
      %647 = vmatprep.subr.bf16.mxu0 0
      %648 = vmatpush1.bf16.msra.mxu0 %v574
      %649 = vmatprep.subr.bf16.mxu0 0
      %650 = vmatpush1.bf16.msra.mxu0 %v575
      %651 = vmatprep.subr.bf16.mxu0 0
      %652 = vmatpush1.bf16.msra.mxu0 %v576
      %653 = vmatprep.subr.bf16.mxu0 0
      %654 = vmatpush1.bf16.msra.mxu0 %v577
      %655 = vmatprep.subr.bf16.mxu0 0
      %656 = vmatpush1.bf16.msra.mxu0 %v578
      %657 = vmatprep.subr.bf16.mxu0 0
      %658 = vmatpush1.bf16.msra.mxu0 %v579
      %659 = vmatprep.subr.bf16.mxu0 0
      %660 = vmatpush1.bf16.msra.mxu0 %v580
      %661 = vmatprep.subr.bf16.mxu0 0
      %662 = vmatpush1.bf16.msra.mxu0 %v581
      %663 = vmatprep.subr.bf16.mxu0 0
      %664 = vmatpush1.bf16.msra.mxu0 0
      %665 = vmatprep.subr.bf16.mxu0 0
      %666 = vmatpush1.bf16.msra.mxu0 0
      %667 = vmatprep.subr.bf16.mxu0 0
      %668 = vmatpush1.bf16.msra.mxu0 0
      %669 = vmatprep.subr.bf16.mxu0 0
      %670 = vmatpush1.bf16.msra.mxu0 0
      %671 = vmatprep.subr.bf16.mxu0 0
      %672 = vmatpush1.bf16.msra.mxu0 0
      %673 = vmatprep.subr.bf16.mxu0 0
      %674 = vmatpush1.bf16.msra.mxu0 0
      %675 = vmatprep.subr.bf16.mxu0 0
      %676 = vmatpush1.bf16.msra.mxu0 0
      %677 = vmatprep.subr.bf16.mxu0 0
      %678 = vmatpush1.bf16.msra.mxu0 0
      %679 = vmatprep.mubr.bf16.mxu0 0
      %680 = vmatmul.mubr.bf16.gmra.mrb[0].mxu0 %v406
      %v681 = vpop.f32.mrb[0].mxu0
      %v682 = vadd.f32 %v641, %v681
      %v683 = vpop.f32.mrb[0].mxu0
      %v684 = vpop.f32.mrb[0].mxu0
      %v685 = vadd.f32 %v644, %v684
      %v686 = vpop.f32.mrb[0].mxu0
      %687 = vdwg.mxu0
      %v688 = vmax.f32 %v682, 0.0
      %v689 = vmax.f32 %v685, 0.0
      %v690 = vrot.slane %v688, 7
      %v691 = vrot.slane %v689, 7
      %v692 = vsel %vm388, %v690, %v691
      %v693 = vsel %vm388, %v691, %v690
      %v694 = vsel %vm391, 0.0, %v693
      %v695 = vsel %vm392, 0.0, %v692
      %v696 = vrot.slane %v688, 1
      %v697 = vrot.slane %v689, 1
      %v698 = vsel %vm397, %v696, %v697
      %v699 = vsel %vm397, %v697, %v696
      %v700 = vsel %vm400, 0.0, %v698
      %v701 = vsel %vm401, 0.0, %v699
      %v702 = vpack.c.bf16 %v695, %v694
      %v703 = vpack.c.bf16 %v689, %v688
      %v704 = vpack.c.bf16 %v701, %v700
      %v705 = vld [vmem:[%s3] sm:$0xf]
      %v706 = vld [vmem:[%s3 + $0x4] sm:$0xf]
      %v707 = vld [vmem:[%s3 + $0x8] sm:$0xf]
      %v708 = vld [vmem:[%s3 + $0xc] sm:$0xf]
      %v709 = vld [vmem:[%s3 + $0x10] sm:$0xf]
      %v710 = vld [vmem:[%s3 + $0x14] sm:$0xf]
      %v711 = vld [vmem:[%s3 + $0x18] sm:$0xf]
      %v712 = vld [vmem:[%s3 + $0x1c] sm:$0xf]
      %v713 = vld [vmem:[%s3 + $0x20] sm:$0xf]
      %v714 = vld [vmem:[%s3 + $0x24] sm:$0xf]
      %v715 = vld [vmem:[%s3 + $0x28] sm:$0xf]
      %v716 = vld [vmem:[%s3 + $0x2c] sm:$0xf]
      %v717 = vld [vmem:[%s3 + $0x30] sm:$0xf]
      %v718 = vld [vmem:[%s3 + $0x34] sm:$0xf]
      %v719 = vld [vmem:[%s3 + $0x38] sm:$0xf]
      %v720 = vld [vmem:[%s3 + $0x3c] sm:$0xf]
      %v721 = vld [vmem:[%s3 + $0x40] sm:$0xf]
      %v722 = vld [vmem:[%s3 + $0x44] sm:$0xf]
      %v723 = vld [vmem:[%s3 + $0x48] sm:$0xf]
      %v724 = vld [vmem:[%s3 + $0x4c] sm:$0xf]
      %v725 = vld [vmem:[%s3 + $0x50] sm:$0xf]
      %v726 = vld [vmem:[%s3 + $0x54] sm:$0xf]
      %v727 = vld [vmem:[%s3 + $0x58] sm:$0xf]
      %v728 = vld [vmem:[%s3 + $0x5c] sm:$0xf]
      %v729 = vld [vmem:[%s3 + $0x60] sm:$0xf]
      %v730 = vld [vmem:[%s3 + $0x64] sm:$0xf]
      %v731 = vld [vmem:[%s3 + $0x68] sm:$0xf]
      %v732 = vld [vmem:[%s3 + $0x6c] sm:$0xf]
      %v733 = vld [vmem:[%s3 + $0x70] sm:$0xf]
      %v734 = vld [vmem:[%s3 + $0x74] sm:$0xf]
      %v735 = vld [vmem:[%s3 + $0x78] sm:$0xf]
      %v736 = vld [vmem:[%s3 + $0x7c] sm:$0xf]
      %v737 = vld [vmem:[%s3 + $0x80] sm:$0xf]
      %v738 = vld [vmem:[%s3 + $0x84] sm:$0xf]
      %v739 = vld [vmem:[%s3 + $0x88] sm:$0xf]
      %v740 = vld [vmem:[%s3 + $0x8c] sm:$0xf]
      %v741 = vld [vmem:[%s3 + $0x90] sm:$0xf]
      %v742 = vld [vmem:[%s3 + $0x94] sm:$0xf]
      %v743 = vld [vmem:[%s3 + $0x98] sm:$0xf]
      %v744 = vld [vmem:[%s3 + $0x9c] sm:$0xf]
      %v745 = vld [vmem:[%s3 + $0xa0] sm:$0xf]
      %v746 = vld [vmem:[%s3 + $0xa4] sm:$0xf]
      %v747 = vld [vmem:[%s3 + $0xa8] sm:$0xf]
      %v748 = vld [vmem:[%s3 + $0xac] sm:$0xf]
      %v749 = vld [vmem:[%s3 + $0xb0] sm:$0xf]
      %v750 = vld [vmem:[%s3 + $0xb4] sm:$0xf]
      %v751 = vld [vmem:[%s3 + $0xb8] sm:$0xf]
      %v752 = vld [vmem:[%s3 + $0xbc] sm:$0xf]
      %v753 = vld [vmem:[%s4] sm:$0x1]
      %v755 = vlaneseq
      %v756 = vshrl.u32 %v755, 7
      %v757 = vsub.s32 0, %v756
      %v758 = vrot.slane %v753, %v757
      %v808 = vunpack.c.l.b16 %v705
      %v809 = vunpack.c.l.b16 %v706
      %v810 = vunpack.c.l.b16 %v707
      %v811 = vunpack.c.l.b16 %v708
      %v812 = vunpack.c.l.b16 %v709
      %v813 = vunpack.c.l.b16 %v710
      %v814 = vunpack.c.l.b16 %v711
      %v815 = vunpack.c.l.b16 %v712
      %v816 = vunpack.c.l.b16 %v713
      %v817 = vunpack.c.l.b16 %v714
      %v818 = vunpack.c.l.b16 %v715
      %v819 = vunpack.c.l.b16 %v716
      %v820 = vunpack.c.l.b16 %v717
      %v821 = vunpack.c.l.b16 %v718
      %v822 = vunpack.c.l.b16 %v719
      %v823 = vunpack.c.l.b16 %v720
      %v824 = vunpack.c.l.b16 %v721
      %v825 = vunpack.c.l.b16 %v722
      %v826 = vunpack.c.l.b16 %v723
      %v827 = vunpack.c.l.b16 %v724
      %v828 = vunpack.c.l.b16 %v725
      %v829 = vunpack.c.l.b16 %v726
      %v830 = vunpack.c.l.b16 %v727
      %v831 = vunpack.c.l.b16 %v728
      %v832 = vunpack.c.l.b16 %v729
      %v833 = vunpack.c.l.b16 %v730
      %v834 = vunpack.c.l.b16 %v731
      %v835 = vunpack.c.l.b16 %v732
      %v836 = vunpack.c.l.b16 %v733
      %v837 = vunpack.c.l.b16 %v734
      %v838 = vunpack.c.l.b16 %v735
      %v839 = vunpack.c.l.b16 %v736
      %v840 = vunpack.c.l.b16 %v737
      %v841 = vunpack.c.l.b16 %v738
      %v842 = vunpack.c.l.b16 %v739
      %v843 = vunpack.c.l.b16 %v740
      %v844 = vunpack.c.l.b16 %v741
      %v845 = vunpack.c.l.b16 %v742
      %v846 = vunpack.c.l.b16 %v743
      %v847 = vunpack.c.l.b16 %v744
      %v848 = vunpack.c.l.b16 %v745
      %v849 = vunpack.c.l.b16 %v746
      %v850 = vunpack.c.l.b16 %v747
      %v851 = vunpack.c.l.b16 %v748
      %v852 = vunpack.c.l.b16 %v749
      %v853 = vunpack.c.l.b16 %v750
      %v854 = vunpack.c.l.b16 %v751
      %v855 = vunpack.c.l.b16 %v752
      %v856 = vpack.c.b16 %v809, %v808
      %v857 = vpack.c.b16 %v811, %v810
      %v858 = vpack.c.b16 %v813, %v812
      %v859 = vpack.c.b16 %v815, %v814
      %v860 = vpack.c.b16 %v817, %v816
      %v861 = vpack.c.b16 %v819, %v818
      %v862 = vpack.c.b16 %v821, %v820
      %v863 = vpack.c.b16 %v823, %v822
      %v864 = vpack.c.b16 %v825, %v824
      %v865 = vpack.c.b16 %v827, %v826
      %v866 = vpack.c.b16 %v829, %v828
      %v867 = vpack.c.b16 %v831, %v830
      %v868 = vpack.c.b16 %v833, %v832
      %v869 = vpack.c.b16 %v835, %v834
      %v870 = vpack.c.b16 %v837, %v836
      %v871 = vpack.c.b16 %v839, %v838
      %v872 = vpack.c.b16 %v841, %v840
      %v873 = vpack.c.b16 %v843, %v842
      %v874 = vpack.c.b16 %v845, %v844
      %v875 = vpack.c.b16 %v847, %v846
      %v876 = vpack.c.b16 %v849, %v848
      %v877 = vpack.c.b16 %v851, %v850
      %v878 = vpack.c.b16 %v853, %v852
      %v879 = vpack.c.b16 %v855, %v854
      %904 = vmatprep.subr.bf16.mxu0 0
      %905 = vmatpush1.bf16.msra.mxu0 %v856
      %906 = vmatprep.subr.bf16.mxu0 0
      %907 = vmatpush1.bf16.msra.mxu0 %v857
      %908 = vmatprep.subr.bf16.mxu0 0
      %909 = vmatpush1.bf16.msra.mxu0 %v858
      %910 = vmatprep.subr.bf16.mxu0 0
      %911 = vmatpush1.bf16.msra.mxu0 %v859
      %912 = vmatprep.subr.bf16.mxu0 0
      %913 = vmatpush1.bf16.msra.mxu0 %v860
      %914 = vmatprep.subr.bf16.mxu0 0
      %915 = vmatpush1.bf16.msra.mxu0 %v861
      %916 = vmatprep.subr.bf16.mxu0 0
      %917 = vmatpush1.bf16.msra.mxu0 %v862
      %918 = vmatprep.subr.bf16.mxu0 0
      %919 = vmatpush1.bf16.msra.mxu0 %v863
      %920 = vmatprep.subr.bf16.mxu0 0
      %921 = vmatpush1.bf16.msra.mxu0 %v864
      %922 = vmatprep.subr.bf16.mxu0 0
      %923 = vmatpush1.bf16.msra.mxu0 %v865
      %924 = vmatprep.subr.bf16.mxu0 0
      %925 = vmatpush1.bf16.msra.mxu0 %v866
      %926 = vmatprep.subr.bf16.mxu0 0
      %927 = vmatpush1.bf16.msra.mxu0 %v867
      %928 = vmatprep.subr.bf16.mxu0 0
      %929 = vmatpush1.bf16.msra.mxu0 %v868
      %930 = vmatprep.subr.bf16.mxu0 0
      %931 = vmatpush1.bf16.msra.mxu0 %v869
      %932 = vmatprep.subr.bf16.mxu0 0
      %933 = vmatpush1.bf16.msra.mxu0 %v870
      %934 = vmatprep.subr.bf16.mxu0 0
      %935 = vmatpush1.bf16.msra.mxu0 %v871
      %936 = vmatprep.mubr.bf16.mxu0 %v703
      %937 = vmatmul.mubr.bf16.gmra.mrb[0].mxu0 %v702
      %v938 = vpop.f32.mrb[0].mxu0
      %v939 = vadd.f32 %v758, %v938
      %v940 = vpop.f32.mrb[0].mxu0
      %v941 = vpop.f32.mrb[0].mxu0
      %v942 = vadd.f32 %v758, %v941
      %v943 = vpop.f32.mrb[0].mxu0
      %944 = vdwg.mxu0
      %945 = vmatprep.subr.bf16.mxu0 0
      %946 = vmatpush1.bf16.msra.mxu0 %v872
      %947 = vmatprep.subr.bf16.mxu0 0
      %948 = vmatpush1.bf16.msra.mxu0 %v873
      %949 = vmatprep.subr.bf16.mxu0 0
      %950 = vmatpush1.bf16.msra.mxu0 %v874
      %951 = vmatprep.subr.bf16.mxu0 0
      %952 = vmatpush1.bf16.msra.mxu0 %v875
      %953 = vmatprep.subr.bf16.mxu0 0
      %954 = vmatpush1.bf16.msra.mxu0 %v876
      %955 = vmatprep.subr.bf16.mxu0 0
      %956 = vmatpush1.bf16.msra.mxu0 %v877
      %957 = vmatprep.subr.bf16.mxu0 0
      %958 = vmatpush1.bf16.msra.mxu0 %v878
      %959 = vmatprep.subr.bf16.mxu0 0
      %960 = vmatpush1.bf16.msra.mxu0 %v879
      %961 = vmatprep.subr.bf16.mxu0 0
      %962 = vmatpush1.bf16.msra.mxu0 0
      %963 = vmatprep.subr.bf16.mxu0 0
      %964 = vmatpush1.bf16.msra.mxu0 0
      %965 = vmatprep.subr.bf16.mxu0 0
      %966 = vmatpush1.bf16.msra.mxu0 0
      %967 = vmatprep.subr.bf16.mxu0 0
      %968 = vmatpush1.bf16.msra.mxu0 0
      %969 = vmatprep.subr.bf16.mxu0 0
      %970 = vmatpush1.bf16.msra.mxu0 0
      %971 = vmatprep.subr.bf16.mxu0 0
      %972 = vmatpush1.bf16.msra.mxu0 0
      %973 = vmatprep.subr.bf16.mxu0 0
      %974 = vmatpush1.bf16.msra.mxu0 0
      %975 = vmatprep.subr.bf16.mxu0 0
      %976 = vmatpush1.bf16.msra.mxu0 0
      %977 = vmatprep.mubr.bf16.mxu0 0
      %978 = vmatmul.mubr.bf16.gmra.mrb[0].mxu0 %v704
      %v979 = vpop.f32.mrb[0].mxu0
      %v980 = vadd.f32 %v939, %v979
      %v981 = vpop.f32.mrb[0].mxu0
      %v982 = vpop.f32.mrb[0].mxu0
      %v983 = vadd.f32 %v942, %v982
      %v984 = vpop.f32.mrb[0].mxu0
      %985 = vdwg.mxu0
      %v986 = vld [vmem:[%s374] sm:$0xff]
      %v987 = vld [vmem:[%s374 + $0x8] sm:$0xff]
      %v988 = vmul.f32 %v986, 0.5
      %v989 = vmul.f32 %v987, 0.5
      %v990 = vsub.f32 %v988, 0.5
      %v991 = vsub.f32 %v989, 0.5
      %v992 = vmul.f32 %v990, 0.25
      %v993 = vmul.f32 %v991, 0.25
      %v994 = vadd.f32 %v980, %v992
      %v995 = vadd.f32 %v983, %v993
      %v996 = vrot.slane %v994, 7
      %v997 = vrot.slane %v995, 7
      %v998 = vsel %vm388, %v996, %v997
      %v999 = vsel %vm388, %v997, %v996
      %v1000 = vsel %vm391, 0.0, %v999
      %v1001 = vsel %vm392, 0.0, %v998
      %v1002 = vrot.slane %v994, 1
      %v1003 = vrot.slane %v995, 1
      %v1004 = vsel %vm397, %v1002, %v1003
      %v1005 = vsel %vm397, %v1003, %v1002
      %v1006 = vsel %vm400, 0.0, %v1004
      %v1007 = vsel %vm401, 0.0, %v1005
      %v1008 = vpack.c.bf16 %v1001, %v1000
      %v1009 = vpack.c.bf16 %v995, %v994
      %v1010 = vpack.c.bf16 %v1007, %v1006
      %v1011 = vld [vmem:[%s5] sm:$0xf]
      %v1012 = vld [vmem:[%s5 + $0x4] sm:$0xf]
      %v1013 = vld [vmem:[%s5 + $0x8] sm:$0xf]
      %v1014 = vld [vmem:[%s5 + $0xc] sm:$0xf]
      %v1015 = vld [vmem:[%s5 + $0x10] sm:$0xf]
      %v1016 = vld [vmem:[%s5 + $0x14] sm:$0xf]
      %v1017 = vld [vmem:[%s5 + $0x18] sm:$0xf]
      %v1018 = vld [vmem:[%s5 + $0x1c] sm:$0xf]
      %v1019 = vld [vmem:[%s5 + $0x20] sm:$0xf]
      %v1020 = vld [vmem:[%s5 + $0x24] sm:$0xf]
      %v1021 = vld [vmem:[%s5 + $0x28] sm:$0xf]
      %v1022 = vld [vmem:[%s5 + $0x2c] sm:$0xf]
      %v1023 = vld [vmem:[%s5 + $0x30] sm:$0xf]
      %v1024 = vld [vmem:[%s5 + $0x34] sm:$0xf]
      %v1025 = vld [vmem:[%s5 + $0x38] sm:$0xf]
      %v1026 = vld [vmem:[%s5 + $0x3c] sm:$0xf]
      %v1027 = vld [vmem:[%s5 + $0x40] sm:$0xf]
      %v1028 = vld [vmem:[%s5 + $0x44] sm:$0xf]
      %v1029 = vld [vmem:[%s5 + $0x48] sm:$0xf]
      %v1030 = vld [vmem:[%s5 + $0x4c] sm:$0xf]
      %v1031 = vld [vmem:[%s5 + $0x50] sm:$0xf]
      %v1032 = vld [vmem:[%s5 + $0x54] sm:$0xf]
      %v1033 = vld [vmem:[%s5 + $0x58] sm:$0xf]
      %v1034 = vld [vmem:[%s5 + $0x5c] sm:$0xf]
      %v1035 = vld [vmem:[%s5 + $0x60] sm:$0xf]
      %v1036 = vld [vmem:[%s5 + $0x64] sm:$0xf]
      %v1037 = vld [vmem:[%s5 + $0x68] sm:$0xf]
      %v1038 = vld [vmem:[%s5 + $0x6c] sm:$0xf]
      %v1039 = vld [vmem:[%s5 + $0x70] sm:$0xf]
      %v1040 = vld [vmem:[%s5 + $0x74] sm:$0xf]
      %v1041 = vld [vmem:[%s5 + $0x78] sm:$0xf]
      %v1042 = vld [vmem:[%s5 + $0x7c] sm:$0xf]
      %v1043 = vld [vmem:[%s5 + $0x80] sm:$0xf]
      %v1044 = vld [vmem:[%s5 + $0x84] sm:$0xf]
      %v1045 = vld [vmem:[%s5 + $0x88] sm:$0xf]
      %v1046 = vld [vmem:[%s5 + $0x8c] sm:$0xf]
      %v1047 = vld [vmem:[%s5 + $0x90] sm:$0xf]
      %v1048 = vld [vmem:[%s5 + $0x94] sm:$0xf]
      %v1049 = vld [vmem:[%s5 + $0x98] sm:$0xf]
      %v1050 = vld [vmem:[%s5 + $0x9c] sm:$0xf]
      %v1051 = vld [vmem:[%s5 + $0xa0] sm:$0xf]
      %v1052 = vld [vmem:[%s5 + $0xa4] sm:$0xf]
      %v1053 = vld [vmem:[%s5 + $0xa8] sm:$0xf]
      %v1054 = vld [vmem:[%s5 + $0xac] sm:$0xf]
      %v1055 = vld [vmem:[%s5 + $0xb0] sm:$0xf]
      %v1056 = vld [vmem:[%s5 + $0xb4] sm:$0xf]
      %v1057 = vld [vmem:[%s5 + $0xb8] sm:$0xf]
      %v1058 = vld [vmem:[%s5 + $0xbc] sm:$0xf]
      %v1059 = vld [vmem:[%s6] sm:$0x1]
      %v1061 = vlaneseq
      %v1062 = vshrl.u32 %v1061, 7
      %v1063 = vsub.s32 0, %v1062
      %v1064 = vrot.slane %v1059, %v1063
      %v1114 = vunpack.c.l.b16 %v1011
      %v1115 = vunpack.c.l.b16 %v1012
      %v1116 = vunpack.c.l.b16 %v1013
      %v1117 = vunpack.c.l.b16 %v1014
      %v1118 = vunpack.c.l.b16 %v1015
      %v1119 = vunpack.c.l.b16 %v1016
      %v1120 = vunpack.c.l.b16 %v1017
      %v1121 = vunpack.c.l.b16 %v1018
      %v1122 = vunpack.c.l.b16 %v1019
      %v1123 = vunpack.c.l.b16 %v1020
      %v1124 = vunpack.c.l.b16 %v1021
      %v1125 = vunpack.c.l.b16 %v1022
      %v1126 = vunpack.c.l.b16 %v1023
      %v1127 = vunpack.c.l.b16 %v1024
      %v1128 = vunpack.c.l.b16 %v1025
      %v1129 = vunpack.c.l.b16 %v1026
      %v1130 = vunpack.c.l.b16 %v1027
      %v1131 = vunpack.c.l.b16 %v1028
      %v1132 = vunpack.c.l.b16 %v1029
      %v1133 = vunpack.c.l.b16 %v1030
      %v1134 = vunpack.c.l.b16 %v1031
      %v1135 = vunpack.c.l.b16 %v1032
      %v1136 = vunpack.c.l.b16 %v1033
      %v1137 = vunpack.c.l.b16 %v1034
      %v1138 = vunpack.c.l.b16 %v1035
      %v1139 = vunpack.c.l.b16 %v1036
      %v1140 = vunpack.c.l.b16 %v1037
      %v1141 = vunpack.c.l.b16 %v1038
      %v1142 = vunpack.c.l.b16 %v1039
      %v1143 = vunpack.c.l.b16 %v1040
      %v1144 = vunpack.c.l.b16 %v1041
      %v1145 = vunpack.c.l.b16 %v1042
      %v1146 = vunpack.c.l.b16 %v1043
      %v1147 = vunpack.c.l.b16 %v1044
      %v1148 = vunpack.c.l.b16 %v1045
      %v1149 = vunpack.c.l.b16 %v1046
      %v1150 = vunpack.c.l.b16 %v1047
      %v1151 = vunpack.c.l.b16 %v1048
      %v1152 = vunpack.c.l.b16 %v1049
      %v1153 = vunpack.c.l.b16 %v1050
      %v1154 = vunpack.c.l.b16 %v1051
      %v1155 = vunpack.c.l.b16 %v1052
      %v1156 = vunpack.c.l.b16 %v1053
      %v1157 = vunpack.c.l.b16 %v1054
      %v1158 = vunpack.c.l.b16 %v1055
      %v1159 = vunpack.c.l.b16 %v1056
      %v1160 = vunpack.c.l.b16 %v1057
      %v1161 = vunpack.c.l.b16 %v1058
      %v1162 = vpack.c.b16 %v1115, %v1114
      %v1163 = vpack.c.b16 %v1117, %v1116
      %v1164 = vpack.c.b16 %v1119, %v1118
      %v1165 = vpack.c.b16 %v1121, %v1120
      %v1166 = vpack.c.b16 %v1123, %v1122
      %v1167 = vpack.c.b16 %v1125, %v1124
      %v1168 = vpack.c.b16 %v1127, %v1126
      %v1169 = vpack.c.b16 %v1129, %v1128
      %v1170 = vpack.c.b16 %v1131, %v1130
      %v1171 = vpack.c.b16 %v1133, %v1132
      %v1172 = vpack.c.b16 %v1135, %v1134
      %v1173 = vpack.c.b16 %v1137, %v1136
      %v1174 = vpack.c.b16 %v1139, %v1138
      %v1175 = vpack.c.b16 %v1141, %v1140
      %v1176 = vpack.c.b16 %v1143, %v1142
      %v1177 = vpack.c.b16 %v1145, %v1144
      %v1178 = vpack.c.b16 %v1147, %v1146
      %v1179 = vpack.c.b16 %v1149, %v1148
      %v1180 = vpack.c.b16 %v1151, %v1150
      %v1181 = vpack.c.b16 %v1153, %v1152
      %v1182 = vpack.c.b16 %v1155, %v1154
      %v1183 = vpack.c.b16 %v1157, %v1156
      %v1184 = vpack.c.b16 %v1159, %v1158
      %v1185 = vpack.c.b16 %v1161, %v1160
      %1210 = vmatprep.subr.bf16.mxu0 0
      %1211 = vmatpush1.bf16.msra.mxu0 %v1162
      %1212 = vmatprep.subr.bf16.mxu0 0
      %1213 = vmatpush1.bf16.msra.mxu0 %v1163
      %1214 = vmatprep.subr.bf16.mxu0 0
      %1215 = vmatpush1.bf16.msra.mxu0 %v1164
      %1216 = vmatprep.subr.bf16.mxu0 0
      %1217 = vmatpush1.bf16.msra.mxu0 %v1165
      %1218 = vmatprep.subr.bf16.mxu0 0
      %1219 = vmatpush1.bf16.msra.mxu0 %v1166
      %1220 = vmatprep.subr.bf16.mxu0 0
      %1221 = vmatpush1.bf16.msra.mxu0 %v1167
      %1222 = vmatprep.subr.bf16.mxu0 0
      %1223 = vmatpush1.bf16.msra.mxu0 %v1168
      %1224 = vmatprep.subr.bf16.mxu0 0
      %1225 = vmatpush1.bf16.msra.mxu0 %v1169
      %1226 = vmatprep.subr.bf16.mxu0 0
      %1227 = vmatpush1.bf16.msra.mxu0 %v1170
      %1228 = vmatprep.subr.bf16.mxu0 0
      %1229 = vmatpush1.bf16.msra.mxu0 %v1171
      %1230 = vmatprep.subr.bf16.mxu0 0
      %1231 = vmatpush1.bf16.msra.mxu0 %v1172
      %1232 = vmatprep.subr.bf16.mxu0 0
      %1233 = vmatpush1.bf16.msra.mxu0 %v1173
      %1234 = vmatprep.subr.bf16.mxu0 0
      %1235 = vmatpush1.bf16.msra.mxu0 %v1174
      %1236 = vmatprep.subr.bf16.mxu0 0
      %1237 = vmatpush1.bf16.msra.mxu0 %v1175
      %1238 = vmatprep.subr.bf16.mxu0 0
      %1239 = vmatpush1.bf16.msra.mxu0 %v1176
      %1240 = vmatprep.subr.bf16.mxu0 0
      %1241 = vmatpush1.bf16.msra.mxu0 %v1177
      %1242 = vmatprep.mubr.bf16.mxu0 %v1009
      %1243 = vmatmul.mubr.bf16.gmra.mrb[0].mxu0 %v1008
      %v1244 = vpop.f32.mrb[0].mxu0
      %v1245 = vadd.f32 %v1064, %v1244
      %v1246 = vpop.f32.mrb[0].mxu0
      %v1247 = vpop.f32.mrb[0].mxu0
      %v1248 = vadd.f32 %v1064, %v1247
      %v1249 = vpop.f32.mrb[0].mxu0
      %1250 = vdwg.mxu0
      %1251 = vmatprep.subr.bf16.mxu0 0
      %1252 = vmatpush1.bf16.msra.mxu0 %v1178
      %1253 = vmatprep.subr.bf16.mxu0 0
      %1254 = vmatpush1.bf16.msra.mxu0 %v1179
      %1255 = vmatprep.subr.bf16.mxu0 0
      %1256 = vmatpush1.bf16.msra.mxu0 %v1180
      %1257 = vmatprep.subr.bf16.mxu0 0
      %1258 = vmatpush1.bf16.msra.mxu0 %v1181
      %1259 = vmatprep.subr.bf16.mxu0 0
      %1260 = vmatpush1.bf16.msra.mxu0 %v1182
      %1261 = vmatprep.subr.bf16.mxu0 0
      %1262 = vmatpush1.bf16.msra.mxu0 %v1183
      %1263 = vmatprep.subr.bf16.mxu0 0
      %1264 = vmatpush1.bf16.msra.mxu0 %v1184
      %1265 = vmatprep.subr.bf16.mxu0 0
      %1266 = vmatpush1.bf16.msra.mxu0 %v1185
      %1267 = vmatprep.subr.bf16.mxu0 0
      %1268 = vmatpush1.bf16.msra.mxu0 0
      %1269 = vmatprep.subr.bf16.mxu0 0
      %1270 = vmatpush1.bf16.msra.mxu0 0
      %1271 = vmatprep.subr.bf16.mxu0 0
      %1272 = vmatpush1.bf16.msra.mxu0 0
      %1273 = vmatprep.subr.bf16.mxu0 0
      %1274 = vmatpush1.bf16.msra.mxu0 0
      %1275 = vmatprep.subr.bf16.mxu0 0
      %1276 = vmatpush1.bf16.msra.mxu0 0
      %1277 = vmatprep.subr.bf16.mxu0 0
      %1278 = vmatpush1.bf16.msra.mxu0 0
      %1279 = vmatprep.subr.bf16.mxu0 0
      %1280 = vmatpush1.bf16.msra.mxu0 0
      %1281 = vmatprep.subr.bf16.mxu0 0
      %1282 = vmatpush1.bf16.msra.mxu0 0
      %1283 = vmatprep.mubr.bf16.mxu0 0
      %1284 = vmatmul.mubr.bf16.gmra.mrb[0].mxu0 %v1010
      %v1285 = vpop.f32.mrb[0].mxu0
      %v1286 = vadd.f32 %v1245, %v1285
      %v1287 = vpop.f32.mrb[0].mxu0
      %v1288 = vpop.f32.mrb[0].mxu0
      %v1289 = vadd.f32 %v1248, %v1288
      %v1290 = vpop.f32.mrb[0].mxu0
      %1291 = vdwg.mxu0
      %v1292 = vmax.f32 %v1286, 0.0
      %v1293 = vmax.f32 %v1289, 0.0
      %v1294 = vrot.slane %v1292, 7
      %v1295 = vrot.slane %v1293, 7
      %v1296 = vsel %vm388, %v1294, %v1295
      %v1297 = vsel %vm388, %v1295, %v1294
      %v1298 = vsel %vm391, 0.0, %v1297
      %v1299 = vsel %vm392, 0.0, %v1296
      %v1300 = vrot.slane %v1292, 1
      %v1301 = vrot.slane %v1293, 1
      %v1302 = vsel %vm397, %v1300, %v1301
      %v1303 = vsel %vm397, %v1301, %v1300
      %v1304 = vsel %vm400, 0.0, %v1302
      %v1305 = vsel %vm401, 0.0, %v1303
      %v1306 = vpack.c.bf16 %v1299, %v1298
      %v1307 = vpack.c.bf16 %v1293, %v1292
      %v1308 = vpack.c.bf16 %v1305, %v1304
      %v1309 = vld [vmem:[%s7] sm:$0xf]
      %v1310 = vld [vmem:[%s7 + $0x4] sm:$0xf]
      %v1311 = vld [vmem:[%s7 + $0x8] sm:$0xf]
      %v1312 = vld [vmem:[%s7 + $0xc] sm:$0xf]
      %v1313 = vld [vmem:[%s7 + $0x10] sm:$0xf]
      %v1314 = vld [vmem:[%s7 + $0x14] sm:$0xf]
      %v1315 = vld [vmem:[%s7 + $0x18] sm:$0xf]
      %v1316 = vld [vmem:[%s7 + $0x1c] sm:$0xf]
      %v1317 = vld [vmem:[%s7 + $0x20] sm:$0xf]
      %v1318 = vld [vmem:[%s7 + $0x24] sm:$0xf]
      %v1319 = vld [vmem:[%s7 + $0x28] sm:$0xf]
      %v1320 = vld [vmem:[%s7 + $0x2c] sm:$0xf]
      %v1321 = vld [vmem:[%s7 + $0x30] sm:$0xf]
      %v1322 = vld [vmem:[%s7 + $0x34] sm:$0xf]
      %v1323 = vld [vmem:[%s7 + $0x38] sm:$0xf]
      %v1324 = vld [vmem:[%s7 + $0x3c] sm:$0xf]
      %v1325 = vld [vmem:[%s7 + $0x40] sm:$0xf]
      %v1326 = vld [vmem:[%s7 + $0x44] sm:$0xf]
      %v1327 = vld [vmem:[%s7 + $0x48] sm:$0xf]
      %v1328 = vld [vmem:[%s7 + $0x4c] sm:$0xf]
      %v1329 = vld [vmem:[%s7 + $0x50] sm:$0xf]
      %v1330 = vld [vmem:[%s7 + $0x54] sm:$0xf]
      %v1331 = vld [vmem:[%s7 + $0x58] sm:$0xf]
      %v1332 = vld [vmem:[%s7 + $0x5c] sm:$0xf]
      %v1333 = vld [vmem:[%s7 + $0x60] sm:$0xf]
      %v1334 = vld [vmem:[%s7 + $0x64] sm:$0xf]
      %v1335 = vld [vmem:[%s7 + $0x68] sm:$0xf]
      %v1336 = vld [vmem:[%s7 + $0x6c] sm:$0xf]
      %v1337 = vld [vmem:[%s7 + $0x70] sm:$0xf]
      %v1338 = vld [vmem:[%s7 + $0x74] sm:$0xf]
      %v1339 = vld [vmem:[%s7 + $0x78] sm:$0xf]
      %v1340 = vld [vmem:[%s7 + $0x7c] sm:$0xf]
      %v1341 = vld [vmem:[%s7 + $0x80] sm:$0xf]
      %v1342 = vld [vmem:[%s7 + $0x84] sm:$0xf]
      %v1343 = vld [vmem:[%s7 + $0x88] sm:$0xf]
      %v1344 = vld [vmem:[%s7 + $0x8c] sm:$0xf]
      %v1345 = vld [vmem:[%s7 + $0x90] sm:$0xf]
      %v1346 = vld [vmem:[%s7 + $0x94] sm:$0xf]
      %v1347 = vld [vmem:[%s7 + $0x98] sm:$0xf]
      %v1348 = vld [vmem:[%s7 + $0x9c] sm:$0xf]
      %v1349 = vld [vmem:[%s7 + $0xa0] sm:$0xf]
      %v1350 = vld [vmem:[%s7 + $0xa4] sm:$0xf]
      %v1351 = vld [vmem:[%s7 + $0xa8] sm:$0xf]
      %v1352 = vld [vmem:[%s7 + $0xac] sm:$0xf]
      %v1353 = vld [vmem:[%s7 + $0xb0] sm:$0xf]
      %v1354 = vld [vmem:[%s7 + $0xb4] sm:$0xf]
      %v1355 = vld [vmem:[%s7 + $0xb8] sm:$0xf]
      %v1356 = vld [vmem:[%s7 + $0xbc] sm:$0xf]
      %v1357 = vld [vmem:[%s8] sm:$0x1]
      %v1359 = vlaneseq
      %v1360 = vshrl.u32 %v1359, 7
      %v1361 = vsub.s32 0, %v1360
      %v1362 = vrot.slane %v1357, %v1361
      %v1412 = vunpack.c.l.b16 %v1309
      %v1413 = vunpack.c.l.b16 %v1310
      %v1414 = vunpack.c.l.b16 %v1311
      %v1415 = vunpack.c.l.b16 %v1312
      %v1416 = vunpack.c.l.b16 %v1313
      %v1417 = vunpack.c.l.b16 %v1314
      %v1418 = vunpack.c.l.b16 %v1315
      %v1419 = vunpack.c.l.b16 %v1316
      %v1420 = vunpack.c.l.b16 %v1317
      %v1421 = vunpack.c.l.b16 %v1318
      %v1422 = vunpack.c.l.b16 %v1319
      %v1423 = vunpack.c.l.b16 %v1320
      %v1424 = vunpack.c.l.b16 %v1321
      %v1425 = vunpack.c.l.b16 %v1322
      %v1426 = vunpack.c.l.b16 %v1323
      %v1427 = vunpack.c.l.b16 %v1324
      %v1428 = vunpack.c.l.b16 %v1325
      %v1429 = vunpack.c.l.b16 %v1326
      %v1430 = vunpack.c.l.b16 %v1327
      %v1431 = vunpack.c.l.b16 %v1328
      %v1432 = vunpack.c.l.b16 %v1329
      %v1433 = vunpack.c.l.b16 %v1330
      %v1434 = vunpack.c.l.b16 %v1331
      %v1435 = vunpack.c.l.b16 %v1332
      %v1436 = vunpack.c.l.b16 %v1333
      %v1437 = vunpack.c.l.b16 %v1334
      %v1438 = vunpack.c.l.b16 %v1335
      %v1439 = vunpack.c.l.b16 %v1336
      %v1440 = vunpack.c.l.b16 %v1337
      %v1441 = vunpack.c.l.b16 %v1338
      %v1442 = vunpack.c.l.b16 %v1339
      %v1443 = vunpack.c.l.b16 %v1340
      %v1444 = vunpack.c.l.b16 %v1341
      %v1445 = vunpack.c.l.b16 %v1342
      %v1446 = vunpack.c.l.b16 %v1343
      %v1447 = vunpack.c.l.b16 %v1344
      %v1448 = vunpack.c.l.b16 %v1345
      %v1449 = vunpack.c.l.b16 %v1346
      %v1450 = vunpack.c.l.b16 %v1347
      %v1451 = vunpack.c.l.b16 %v1348
      %v1452 = vunpack.c.l.b16 %v1349
      %v1453 = vunpack.c.l.b16 %v1350
      %v1454 = vunpack.c.l.b16 %v1351
      %v1455 = vunpack.c.l.b16 %v1352
      %v1456 = vunpack.c.l.b16 %v1353
      %v1457 = vunpack.c.l.b16 %v1354
      %v1458 = vunpack.c.l.b16 %v1355
      %v1459 = vunpack.c.l.b16 %v1356
      %v1460 = vpack.c.b16 %v1413, %v1412
      %v1461 = vpack.c.b16 %v1415, %v1414
      %v1462 = vpack.c.b16 %v1417, %v1416
      %v1463 = vpack.c.b16 %v1419, %v1418
      %v1464 = vpack.c.b16 %v1421, %v1420
      %v1465 = vpack.c.b16 %v1423, %v1422
      %v1466 = vpack.c.b16 %v1425, %v1424
      %v1467 = vpack.c.b16 %v1427, %v1426
      %v1468 = vpack.c.b16 %v1429, %v1428
      %v1469 = vpack.c.b16 %v1431, %v1430
      %v1470 = vpack.c.b16 %v1433, %v1432
      %v1471 = vpack.c.b16 %v1435, %v1434
      %v1472 = vpack.c.b16 %v1437, %v1436
      %v1473 = vpack.c.b16 %v1439, %v1438
      %v1474 = vpack.c.b16 %v1441, %v1440
      %v1475 = vpack.c.b16 %v1443, %v1442
      %v1476 = vpack.c.b16 %v1445, %v1444
      %v1477 = vpack.c.b16 %v1447, %v1446
      %v1478 = vpack.c.b16 %v1449, %v1448
      %v1479 = vpack.c.b16 %v1451, %v1450
      %v1480 = vpack.c.b16 %v1453, %v1452
      %v1481 = vpack.c.b16 %v1455, %v1454
      %v1482 = vpack.c.b16 %v1457, %v1456
      %v1483 = vpack.c.b16 %v1459, %v1458
      %1508 = vmatprep.subr.bf16.mxu0 0
      %1509 = vmatpush1.bf16.msra.mxu0 %v1460
      %1510 = vmatprep.subr.bf16.mxu0 0
      %1511 = vmatpush1.bf16.msra.mxu0 %v1461
      %1512 = vmatprep.subr.bf16.mxu0 0
      %1513 = vmatpush1.bf16.msra.mxu0 %v1462
      %1514 = vmatprep.subr.bf16.mxu0 0
      %1515 = vmatpush1.bf16.msra.mxu0 %v1463
      %1516 = vmatprep.subr.bf16.mxu0 0
      %1517 = vmatpush1.bf16.msra.mxu0 %v1464
      %1518 = vmatprep.subr.bf16.mxu0 0
      %1519 = vmatpush1.bf16.msra.mxu0 %v1465
      %1520 = vmatprep.subr.bf16.mxu0 0
      %1521 = vmatpush1.bf16.msra.mxu0 %v1466
      %1522 = vmatprep.subr.bf16.mxu0 0
      %1523 = vmatpush1.bf16.msra.mxu0 %v1467
      %1524 = vmatprep.subr.bf16.mxu0 0
      %1525 = vmatpush1.bf16.msra.mxu0 %v1468
      %1526 = vmatprep.subr.bf16.mxu0 0
      %1527 = vmatpush1.bf16.msra.mxu0 %v1469
      %1528 = vmatprep.subr.bf16.mxu0 0
      %1529 = vmatpush1.bf16.msra.mxu0 %v1470
      %1530 = vmatprep.subr.bf16.mxu0 0
      %1531 = vmatpush1.bf16.msra.mxu0 %v1471
      %1532 = vmatprep.subr.bf16.mxu0 0
      %1533 = vmatpush1.bf16.msra.mxu0 %v1472
      %1534 = vmatprep.subr.bf16.mxu0 0
      %1535 = vmatpush1.bf16.msra.mxu0 %v1473
      %1536 = vmatprep.subr.bf16.mxu0 0
      %1537 = vmatpush1.bf16.msra.mxu0 %v1474
      %1538 = vmatprep.subr.bf16.mxu0 0
      %1539 = vmatpush1.bf16.msra.mxu0 %v1475
      %1540 = vmatprep.mubr.bf16.mxu0 %v1307
      %1541 = vmatmul.mubr.bf16.gmra.mrb[0].mxu0 %v1306
      %v1542 = vpop.f32.mrb[0].mxu0
      %v1543 = vadd.f32 %v1362, %v1542
      %v1544 = vpop.f32.mrb[0].mxu0
      %v1545 = vpop.f32.mrb[0].mxu0
      %v1546 = vadd.f32 %v1362, %v1545
      %v1547 = vpop.f32.mrb[0].mxu0
      %1548 = vdwg.mxu0
      %1549 = vmatprep.subr.bf16.mxu0 0
      %1550 = vmatpush1.bf16.msra.mxu0 %v1476
      %1551 = vmatprep.subr.bf16.mxu0 0
      %1552 = vmatpush1.bf16.msra.mxu0 %v1477
      %1553 = vmatprep.subr.bf16.mxu0 0
      %1554 = vmatpush1.bf16.msra.mxu0 %v1478
      %1555 = vmatprep.subr.bf16.mxu0 0
      %1556 = vmatpush1.bf16.msra.mxu0 %v1479
      %1557 = vmatprep.subr.bf16.mxu0 0
      %1558 = vmatpush1.bf16.msra.mxu0 %v1480
      %1559 = vmatprep.subr.bf16.mxu0 0
      %1560 = vmatpush1.bf16.msra.mxu0 %v1481
      %1561 = vmatprep.subr.bf16.mxu0 0
      %1562 = vmatpush1.bf16.msra.mxu0 %v1482
      %1563 = vmatprep.subr.bf16.mxu0 0
      %1564 = vmatpush1.bf16.msra.mxu0 %v1483
      %1565 = vmatprep.subr.bf16.mxu0 0
      %1566 = vmatpush1.bf16.msra.mxu0 0
      %1567 = vmatprep.subr.bf16.mxu0 0
      %1568 = vmatpush1.bf16.msra.mxu0 0
      %1569 = vmatprep.subr.bf16.mxu0 0
      %1570 = vmatpush1.bf16.msra.mxu0 0
      %1571 = vmatprep.subr.bf16.mxu0 0
      %1572 = vmatpush1.bf16.msra.mxu0 0
      %1573 = vmatprep.subr.bf16.mxu0 0
      %1574 = vmatpush1.bf16.msra.mxu0 0
      %1575 = vmatprep.subr.bf16.mxu0 0
      %1576 = vmatpush1.bf16.msra.mxu0 0
      %1577 = vmatprep.subr.bf16.mxu0 0
      %1578 = vmatpush1.bf16.msra.mxu0 0
      %1579 = vmatprep.subr.bf16.mxu0 0
      %1580 = vmatpush1.bf16.msra.mxu0 0
      %1581 = vmatprep.mubr.bf16.mxu0 0
      %1582 = vmatmul.mubr.bf16.gmra.mrb[0].mxu0 %v1308
      %v1583 = vpop.f32.mrb[0].mxu0
      %v1584 = vadd.f32 %v1543, %v1583
      %v1585 = vpop.f32.mrb[0].mxu0
      %v1586 = vpop.f32.mrb[0].mxu0
      %v1587 = vadd.f32 %v1546, %v1586
      %v1588 = vpop.f32.mrb[0].mxu0
      %1589 = vdwg.mxu0
      %v1590 = vsub.f32 0.0, %v1584
      %v1591 = vsub.f32 0.0, %v1587
      %v1592 = vmul.f32 %v1590, 1.442695
      %v1593 = vpow.pop %v1592
      %v1594 = vmul.f32 %v1591, 1.442695
      %v1595 = vpow.pop %v1594
      %v1596 = vadd.f32 %v1593, 1.0
      %v1597 = vadd.f32 %v1595, 1.0
      %v1598 = vrcp.pop %v1596
      %v1599 = vrcp.pop %v1597
      %1600 = vst [vmem:[%s379] sm:$0xff] %v1598
      %1601 = vst [vmem:[%s379 + $0x8] sm:$0xff] %v1599
      %p1602 = scmp.lt.s32.totalorder %s21, 1
      %s1603 = scalar_select %p1602, %s21, 1
      %s1604 = smul.addr %s1603, 2
      %s1605 = smul.addr %s1604, 8
      %s1606 = scalar_lea.vmem %s10, %s1605
      // Predicated region
      $region61: #{autoencoder_forward.1} parent=59 // pred_check
        %p1607 = pneg %p259
      $region62: #{autoencoder_forward.1} parent=59 // pred_check_branch
        %1609 = sbr.rel (%p1607) target = $region64
      $region63: #{autoencoder_forward.1} parent=59 // pred_region
        _
      $region64: #{autoencoder_forward.1} parent=59 // pred_fallthru
        _
    $region60: #{autoencoder_forward.1} parent=5 // pred_fallthru
      _
    %p1610 = scmp.le.s32.totalorder 2, %s16
    // Predicated region
    $region65: #{autoencoder_forward.1} parent=5 // pred_check
      %p1611 = pneg %p1610
    $region66: #{autoencoder_forward.1} parent=5 // pred_check_branch
      %1613 = sbr.rel (%p1611) target = $region68
    $region67: #{autoencoder_forward.1} parent=5 // pred_region
      %s1614 = ssub.s32 %s16, 2
      // Predicated region
      $region69: #{autoencoder_forward.1} parent=67 // pred_check
        %p1615 = pneg %p265
      $region70: #{autoencoder_forward.1} parent=67 // pred_check_branch
        %1617 = sbr.rel (%p1615) target = $region72
      $region71: #{autoencoder_forward.1} parent=67 // pred_region
        %p1618 = scmp.lt.s32.totalorder %s22, 1
        %s1619 = scalar_select %p1618, %s22, 1
        %s1620 = smul.addr %s1619, 2
        %s1621 = smul.addr %s1620, 8
        %s1622 = scalar_lea.vmem %s10, %s1621
      $region72: #{autoencoder_forward.1} parent=67 // pred_fallthru
        _
    $region68: #{autoencoder_forward.1} parent=5 // pred_fallthru
      _
  $region6: #{autoencoder_forward.1} parent=0 // loop_footer
    %s20 = sadd.s32 1, %s16
  $region7: #{autoencoder_forward.1} parent=0 // loop_footer_branch
    %15 = sbr.rel target = $region3
  $region8: #{autoencoder_forward.1} parent=0 // loop_exit
    _

</llo_original>
